<compile_context>
chip_gen: v7x
topology: tpu7x:2x2x1
jax: 0.10.0
libtpu: 0.0.40
codegen_flags: <defaults>
</compile_context>

<pallas_src>
import jax
import jax.numpy as jnp
from jax.experimental import pallas as pl
from jax.experimental.pallas import tpu as pltpu

f32 = jnp.float32
bf16 = jnp.bfloat16


# ---------------------------------------------------------------------------
# Single fused kernel: per node tile, fused weight/gate MLPs + gating + one-hot
# scatter-add into a resident f32 accumulator; mlp_graph applied on the last tile.
# grid = (n_tiles,), axis marked "arbitrary" (reduction over node tiles).
# ---------------------------------------------------------------------------
def _gmn_aggregator_kernel(batch_ref, x_ref, wg1_ref, bc1_ref, wg2_ref, bc2_ref,
                           m1_ref, d1_ref, m2_ref, d2_ref,
                           out_ref, acc_ref, gids_ref):
    t = pl.program_id(0)
    dout_p = out_ref.shape[-1]
    relu = lambda v: jnp.maximum(v, 0.0)

    @pl.when(t == 0)
    def _():
        acc_ref[...] = jnp.zeros_like(acc_ref)
        # Hoisted, grid-invariant graph-id iota (one row index per graph).
        gids_ref[...] = jax.lax.broadcasted_iota(jnp.int32, gids_ref.shape, 0)

    x = x_ref[...]                                              # [tile_n, din_p] bf16
    # Fused first layers of weight_func | gate_func             -> [tile_n, 2*dout_p] f32
    h = relu(jnp.dot(x, wg1_ref[...], preferred_element_type=f32) + bc1_ref[...])
    # Fused (block-diagonal) second layers                      -> [tile_n, 2*dout_p] f32
    z = relu(jnp.dot(h.astype(bf16), wg2_ref[...], preferred_element_type=f32)
             + bc2_ref[...])
    weighted = z[:, :dout_p]
    gate_pre = z[:, dout_p:]
    # sigmoid = 1/(1+exp(-t)); exp on the EUP, approximate reciprocal (EUP slot, ~free).
    gated = pl.reciprocal(1.0 + jnp.exp(-gate_pre), approx=True)
    hammard = gated * weighted                                  # [tile_n, dout_p] f32

    # scatter_add over this tile's graph ids as a one-hot MXU matmul (bf16 operands,
    # exact f32 accumulation).  Padded nodes carry batch id -1 and match no graph row.
    onehot = (gids_ref[...] == batch_ref[...]).astype(bf16)     # [g_pad, tile_n]
    acc_ref[...] += jnp.dot(onehot, hammard.astype(bf16),
                            preferred_element_type=f32)         # [g_pad, dout_p]

    @pl.when(t == pl.num_programs(0) - 1)
    def _():
        # mlp_graph on the accumulated graph embeddings (tiny: g_pad rows).
        ge = acc_ref[...]
        e = relu(jnp.dot(ge.astype(bf16), m1_ref[...],
                         preferred_element_type=f32) + d1_ref[...])
        out_ref[...] = relu(jnp.dot(e.astype(bf16), m2_ref[...],
                                    preferred_element_type=f32) + d2_ref[...])


# ---------------------------------------------------------------------------
# Helpers
# ---------------------------------------------------------------------------
def _round_up(v, m):
    return (v + m - 1) // m * m


def _pad2d(a, rows, cols):
    return jnp.pad(a, ((0, rows - a.shape[0]), (0, cols - a.shape[1])))


def _vmem_budget_bytes():
    """3/4 of physical VMEM: ~48 MiB on v7x (64 MiB), ~96 MiB on v5e/v6e (128 MiB)."""
    try:
        cap = int(pltpu.get_tpu_info().vmem_capacity_bytes)
    except Exception:
        cap = 64 * 1024 * 1024          # conservative fallback (v7x per-TC VMEM)
    return int(cap * 3 // 4)


def _derive_tile_n(n, din_p, dout_p, g_pad, budget):
    """Largest 128-multiple node tile fitting the VMEM budget (capped by node count)."""
    fixed = (din_p * 2 * dout_p * 2                 # wg1 (bf16, single buffer)
             + (2 * dout_p) * (2 * dout_p) * 2      # wg2 (bf16)
             + 2 * (2 * dout_p) * 4                 # bc1, bc2 (f32)
             + 2 * dout_p * dout_p * 2              # m1, m2 (bf16)
             + 2 * dout_p * 4                       # d1, d2 (f32)
             + 2 * g_pad * dout_p * 4)              # acc scratch + output block (f32)
    per_row = (2 * din_p * 2                        # x tile (bf16, double-buffered)
               + 2 * 4                              # batch ids (int32, double-buffered)
               + 2 * (2 * dout_p) * 4               # h, z intermediates (f32)
               + 3 * dout_p * 4                     # weighted / gated / hammard (f32)
               + g_pad * (4 + 2))                   # gids scratch (i32) + one-hot (bf16)
    avail = max(budget - fixed, per_row * 128)
    tile = max(128, min(4096, avail // per_row))
    tile = max(128, (tile // 128) * 128)
    tile = min(tile, _round_up(max(n, 1), 128))     # don't over-tile tiny inputs
    return int(tile)


# ---------------------------------------------------------------------------
# Wrapper
# ---------------------------------------------------------------------------
def gmn_aggregator_forward(x, batch, num_graphs, params, *, tile_n=None):
    """x: [N, D_in] f32, batch: [N] int32 graph ids -> [num_graphs, D_out] f32."""
    n, din = x.shape
    dout = params["w2"].shape[1]

    din_p = _round_up(din, 128)          # lane-dense matmul operands
    dout_p = _round_up(dout, 128)
    g_pad = _round_up(num_graphs, 8)     # sublane-aligned accumulator rows

    budget = _vmem_budget_bytes()
    if tile_n is None:
        tile_n = _derive_tile_n(n, din_p, dout_p, g_pad, budget)
    n_tiles = int(pl.cdiv(n, tile_n))
    n_pad = n_tiles * tile_n

    # Node features: pad + cast to bf16 in one wrapper pass (halves HBM bytes into the kernel).
    x_p = _pad2d(x.astype(f32), n_pad, din_p).astype(bf16)
    # Graph ids: pad tail with -1 so padded nodes scatter nowhere.
    batch_p = jnp.full((1, n_pad), -1, jnp.int32).at[0, :n].set(batch.astype(jnp.int32))

    # Fuse weight_func + gate_func (zero-padded weights keep padded lanes exactly 0).
    w1 = _pad2d(params["w1"], din_p, dout_p); g1 = _pad2d(params["g1"], din_p, dout_p)
    w2 = _pad2d(params["w2"], dout_p, dout_p); g2 = _pad2d(params["g2"], dout_p, dout_p)
    wg1 = jnp.concatenate([w1, g1], axis=1).astype(bf16)              # [din_p, 2*dout_p]
    wg2 = (jnp.zeros((2 * dout_p, 2 * dout_p), f32)
           .at[:dout_p, :dout_p].set(w2)
           .at[dout_p:, dout_p:].set(g2)).astype(bf16)                # block-diagonal
    bc1 = jnp.concatenate([_pad2d(params["b1"], 1, dout_p),
                           _pad2d(params["c1"], 1, dout_p)], axis=1)  # f32 biases
    bc2 = jnp.concatenate([_pad2d(params["b2"], 1, dout_p),
                           _pad2d(params["c2"], 1, dout_p)], axis=1)
    m1 = _pad2d(params["m1"], dout_p, dout_p).astype(bf16)
    m2 = _pad2d(params["m2"], dout_p, dout_p).astype(bf16)
    d1 = _pad2d(params["d1"], 1, dout_p)
    d2 = _pad2d(params["d2"], 1, dout_p)

    def _build_and_run(single_buffer_consts):
        const_kwargs = {}
        if single_buffer_consts and hasattr(pl, "Buffered"):
            const_kwargs = {"pipeline_mode": pl.Buffered(1)}

        def const_spec(shape):
            try:
                return pl.BlockSpec(shape, lambda t: (0,) * len(shape), **const_kwargs)
            except TypeError:
                return pl.BlockSpec(shape, lambda t: (0,) * len(shape))

        grid_spec = pltpu.PrefetchScalarGridSpec(
            num_scalar_prefetch=0,
            grid=(n_tiles,),
            in_specs=[
                pl.BlockSpec((1, tile_n), lambda t: (0, t)),          # batch ids
                pl.BlockSpec((tile_n, din_p), lambda t: (t, 0)),      # x tile
                const_spec((din_p, 2 * dout_p)),                      # wg1
                const_spec((1, 2 * dout_p)),                          # bc1
                const_spec((2 * dout_p, 2 * dout_p)),                 # wg2
                const_spec((1, 2 * dout_p)),                          # bc2
                const_spec((dout_p, dout_p)),                         # m1
                const_spec((1, dout_p)),                              # d1
                const_spec((dout_p, dout_p)),                         # m2
                const_spec((1, dout_p)),                              # d2
            ],
            # Output block resident across the whole (reduction) grid; written on last tile.
            out_specs=pl.BlockSpec((g_pad, dout_p), lambda t: (0, 0)),
            scratch_shapes=[
                pltpu.VMEM((g_pad, dout_p), f32),        # graph-embedding accumulator
                pltpu.VMEM((g_pad, tile_n), jnp.int32),  # hoisted graph-id iota
            ],
        )
        return pl.pallas_call(
            _gmn_aggregator_kernel,
            out_shape=jax.ShapeDtypeStruct((g_pad, dout_p), f32),
            grid_spec=grid_spec,
            compiler_params=pltpu.CompilerParams(
                dimension_semantics=("arbitrary",),
                vmem_limit_bytes=budget,
            ),
        )(batch_p, x_p, wg1, bc1, wg2, bc2, m1, d1, m2, d2)

    try:
        out_p = _build_and_run(True)
    except Exception:
        # Fallback: identical kernel without single-buffered constant inputs.
        out_p = _build_and_run(False)

    return out_p[:num_graphs, :dout]


# ---------------------------------------------------------------------------
# Parameter init (mirrors the torch module: xavier_normal(gain=relu) weights,
# default nn.Linear uniform bias). Weights stored pre-transposed [fan_in, fan_out].
# ---------------------------------------------------------------------------
def _xavier_normal(key, fan_in, fan_out, gain):
    std = gain * jnp.sqrt(2.0 / (fan_in + fan_out))
    return std * jax.random.normal(key, (fan_in, fan_out), dtype=jnp.float32)


def init_params(key, input_dim, output_dim):
    gain = jnp.sqrt(2.0)  # nn.init.calculate_gain('relu')
    keys = jax.random.split(key, 12)
    bias = lambda k, fan_in, d: jax.random.uniform(
        k, (1, d), jnp.float32, -1.0 / jnp.sqrt(fan_in), 1.0 / jnp.sqrt(fan_in))
    return {
        "w1": _xavier_normal(keys[0], input_dim, output_dim, gain),
        "b1": bias(keys[1], input_dim, output_dim),
        "w2": _xavier_normal(keys[2], output_dim, output_dim, gain),
        "b2": bias(keys[3], output_dim, output_dim),
        "g1": _xavier_normal(keys[4], input_dim, output_dim, gain),
        "c1": bias(keys[5], input_dim, output_dim),
        "g2": _xavier_normal(keys[6], output_dim, output_dim, gain),
        "c2": bias(keys[7], output_dim, output_dim),
        "m1": _xavier_normal(keys[8], output_dim, output_dim, gain),
        "d1": bias(keys[9], output_dim, output_dim),
        "m2": _xavier_normal(keys[10], output_dim, output_dim, gain),
        "d2": bias(keys[11], output_dim, output_dim),
    }


def reference_forward(x, batch, num_graphs, p, matmul_dtype=jnp.float32):
    """Plain-JAX reference; matmul_dtype lets us match the kernel's bf16 MXU inputs."""
    relu = lambda v: jnp.maximum(v, 0.0)
    lin = lambda a, w, b: jnp.dot(a.astype(matmul_dtype), w.astype(matmul_dtype),
                                  preferred_element_type=f32) + b
    weighted = relu(lin(relu(lin(x, p["w1"], p["b1"])), p["w2"], p["b2"]))
    gated = jax.nn.sigmoid(relu(lin(relu(lin(x, p["g1"], p["c1"])), p["g2"], p["c2"])))
    h = gated * weighted
    ge = jnp.zeros((num_graphs, h.shape[1]), f32).at[batch].add(h)   # scatter_add
    return relu(lin(relu(lin(ge, p["m1"], p["d1"])), p["m2"], p["d2"]))


if __name__ == "__main__":
    key = jax.random.PRNGKey(0)
    k_x, k_b, k_p = jax.random.split(key, 3)

    num_nodes = 64
    input_dim = 48
    output_dim = 32
    num_graphs = 5

    x = jax.random.normal(k_x, (num_nodes, input_dim), dtype=jnp.float32)
    batch = jax.random.randint(k_b, (num_nodes,), 0, num_graphs, dtype=jnp.int32)
    params = init_params(k_p, input_dim, output_dim)

    out = gmn_aggregator_forward(x, batch, num_graphs, params)
    out = jax.block_until_ready(out)

    # Reference with matmul inputs cast to bf16 (same precision as the kernel's MXU path);
    # remaining deltas: approx-reciprocal sigmoid, bf16-quantized per-node contributions in
    # the scatter matmul, and fp summation order — all well within tolerance.
    ref = reference_forward(x, batch, num_graphs, params, matmul_dtype=jnp.bfloat16)
    assert out.shape == (num_graphs, output_dim)
    assert jnp.allclose(out, ref, atol=5e-2, rtol=5e-2), (
        f"mismatch vs reference, max|diff|={jnp.max(jnp.abs(out - ref))}")

    print("KERNEL_OK")
</pallas_src>

<mosaic_0001>
module attributes {stable_mosaic.version = 11 : i64} {
  func.func @_gmn_aggregator_kernel(%arg0: i32, %arg1: memref<1x128xi32, #tpu.memory_space<vmem>>, %arg2: memref<128x128xbf16, #tpu.memory_space<vmem>>, %arg3: memref<128x256xbf16, #tpu.memory_space<vmem>>, %arg4: memref<1x256xf32, #tpu.memory_space<vmem>>, %arg5: memref<256x256xbf16, #tpu.memory_space<vmem>>, %arg6: memref<1x256xf32, #tpu.memory_space<vmem>>, %arg7: memref<128x128xbf16, #tpu.memory_space<vmem>>, %arg8: memref<1x128xf32, #tpu.memory_space<vmem>>, %arg9: memref<128x128xbf16, #tpu.memory_space<vmem>>, %arg10: memref<1x128xf32, #tpu.memory_space<vmem>>, %arg11: memref<8x128xf32, #tpu.memory_space<vmem>>, %arg12: memref<8x128xf32, #tpu.memory_space<vmem>>, %arg13: memref<8x128xi32, #tpu.memory_space<vmem>>) attributes {dimension_semantics = [#tpu.dimension_semantics<arbitrary>], iteration_bounds = array<i64: 1>, scalar_prefetch = 0 : i64, scratch_operands = 2 : i64, tpu.core_type = #tpu.core_type<tc>, window_params = [{transform_indices = @transform_0, window_bounds = array<i64: 1, 128>}, {transform_indices = @transform_1, window_bounds = array<i64: 128, 128>}, {pipeline_mode = #tpu.pipeline_mode<synchronous>, transform_indices = @transform_2, window_bounds = array<i64: 128, 256>}, {pipeline_mode = #tpu.pipeline_mode<synchronous>, transform_indices = @transform_3, window_bounds = array<i64: 1, 256>}, {pipeline_mode = #tpu.pipeline_mode<synchronous>, transform_indices = @transform_4, window_bounds = array<i64: 256, 256>}, {pipeline_mode = #tpu.pipeline_mode<synchronous>, transform_indices = @transform_5, window_bounds = array<i64: 1, 256>}, {pipeline_mode = #tpu.pipeline_mode<synchronous>, transform_indices = @transform_6, window_bounds = array<i64: 128, 128>}, {pipeline_mode = #tpu.pipeline_mode<synchronous>, transform_indices = @transform_7, window_bounds = array<i64: 1, 128>}, {pipeline_mode = #tpu.pipeline_mode<synchronous>, transform_indices = @transform_8, window_bounds = array<i64: 128, 128>}, {pipeline_mode = #tpu.pipeline_mode<synchronous>, transform_indices = @transform_9, window_bounds = array<i64: 1, 128>}, {pipeline_mode = #tpu.pipeline_mode<synchronous>, transform_indices = @transform_10, window_bounds = array<i64: 8, 128>}]} {
    %c0_i32 = arith.constant 0 : i32
    %0 = arith.cmpi eq, %arg0, %c0_i32 : i32
    %1 = arith.extui %0 : i1 to i32
    %c0_i32_0 = arith.constant 0 : i32
    %2 = arith.cmpi ne, %1, %c0_i32_0 : i32
    scf.if %2 {
      %cst_26 = arith.constant 0.000000e+00 : f32
      %43 = vector.broadcast %cst_26 : f32 to vector<8x128xf32>
      %c0_27 = arith.constant 0 : index
      %c0_28 = arith.constant 0 : index
      %44 = vector.load %arg12[%c0_27, %c0_28] : memref<8x128xf32, #tpu.memory_space<vmem>>, vector<8x128xf32>
      tpu.vector_store %arg12[%c0_27, %c0_28], %43 {strides = array<i32>} : memref<8x128xf32, #tpu.memory_space<vmem>>, vector<8x128xf32>,
      %45 = tpu.iota {dimensions = array<i32: 0>} : vector<8x128xi32>
      %c0_29 = arith.constant 0 : index
      %c0_30 = arith.constant 0 : index
      %46 = vector.load %arg13[%c0_29, %c0_30] : memref<8x128xi32, #tpu.memory_space<vmem>>, vector<8x128xi32>
      tpu.vector_store %arg13[%c0_29, %c0_30], %45 {strides = array<i32>} : memref<8x128xi32, #tpu.memory_space<vmem>>, vector<8x128xi32>,
    } else {
    }
    %c0 = arith.constant 0 : index
    %c0_1 = arith.constant 0 : index
    %3 = vector.load %arg2[%c0, %c0_1] : memref<128x128xbf16, #tpu.memory_space<vmem>>, vector<128x128xbf16>
    %c0_2 = arith.constant 0 : index
    %c0_3 = arith.constant 0 : index
    %4 = vector.load %arg3[%c0_2, %c0_3] : memref<128x256xbf16, #tpu.memory_space<vmem>>, vector<128x256xbf16>
    %cst = arith.constant dense<0.000000e+00> : vector<128x256xf32>
    %5 = tpu.matmul %3, %4, %cst {dimension_numbers = #tpu.dot_dimension_numbers<[1], [0], [0], [1], [0, 0, 1, 1], [], []>} : vector<128x128xbf16>, vector<128x256xbf16>, vector<128x256xf32> -> vector<128x256xf32>
    %c0_4 = arith.constant 0 : index
    %c0_5 = arith.constant 0 : index
    %6 = vector.load %arg4[%c0_4, %c0_5] : memref<1x256xf32, #tpu.memory_space<vmem>>, vector<1x256xf32>
    %7 = vector.broadcast %6 : vector<1x256xf32> to vector<128x256xf32>
    %8 = arith.addf %5, %7 : vector<128x256xf32>
    %cst_6 = arith.constant 0.000000e+00 : f32
    %9 = vector.broadcast %cst_6 : f32 to vector<128x256xf32>
    %10 = arith.maximumf %8, %9 : vector<128x256xf32>
    %11 = arith.truncf %10 : vector<128x256xf32> to vector<128x256xbf16>
    %c0_7 = arith.constant 0 : index
    %c0_8 = arith.constant 0 : index
    %12 = vector.load %arg5[%c0_7, %c0_8] : memref<256x256xbf16, #tpu.memory_space<vmem>>, vector<256x256xbf16>
    %cst_9 = arith.constant dense<0.000000e+00> : vector<128x256xf32>
    %13 = tpu.matmul %11, %12, %cst_9 {dimension_numbers = #tpu.dot_dimension_numbers<[1], [0], [0], [1], [0, 0, 1, 1], [], []>} : vector<128x256xbf16>, vector<256x256xbf16>, vector<128x256xf32> -> vector<128x256xf32>
    %c0_10 = arith.constant 0 : index
    %c0_11 = arith.constant 0 : index
    %14 = vector.load %arg6[%c0_10, %c0_11] : memref<1x256xf32, #tpu.memory_space<vmem>>, vector<1x256xf32>
    %15 = vector.broadcast %14 : vector<1x256xf32> to vector<128x256xf32>
    %16 = arith.addf %13, %15 : vector<128x256xf32>
    %cst_12 = arith.constant 0.000000e+00 : f32
    %17 = vector.broadcast %cst_12 : f32 to vector<128x256xf32>
    %18 = arith.maximumf %16, %17 : vector<128x256xf32>
    %19 = vector.extract_strided_slice %18 {offsets = [0, 0], sizes = [128, 128], strides = [1, 1]} : vector<128x256xf32> to vector<128x128xf32>
    %20 = vector.extract_strided_slice %18 {offsets = [0, 128], sizes = [128, 128], strides = [1, 1]} : vector<128x256xf32> to vector<128x128xf32>
    %cst_13 = arith.constant 0.000000e+00 : f32
    %21 = vector.broadcast %cst_13 : f32 to vector<128x128xf32>
    %22 = arith.subf %21, %20 : vector<128x128xf32>
    %23 = math.exp %22 : vector<128x128xf32>
    %cst_14 = arith.constant 1.000000e+00 : f32
    %24 = vector.broadcast %cst_14 : f32 to vector<128x128xf32>
    %25 = arith.addf %24, %23 : vector<128x128xf32>
    %26 = tpu.reciprocal %25 {approx = true} : vector<128x128xf32> -> vector<128x128xf32>
    %27 = arith.mulf %26, %19 : vector<128x128xf32>
    %c0_15 = arith.constant 0 : index
    %c0_16 = arith.constant 0 : index
    %28 = vector.load %arg13[%c0_15, %c0_16] : memref<8x128xi32, #tpu.memory_space<vmem>>, vector<8x128xi32>
    %c0_17 = arith.constant 0 : index
    %c0_18 = arith.constant 0 : index
    %29 = vector.load %arg1[%c0_17, %c0_18] : memref<1x128xi32, #tpu.memory_space<vmem>>, vector<1x128xi32>
    %30 = vector.broadcast %29 : vector<1x128xi32> to vector<8x128xi32>
    %31 = arith.cmpi eq, %28, %30 : vector<8x128xi32>
    %32 = arith.extui %31 : vector<8x128xi1> to vector<8x128xi32>
    %33 = arith.sitofp %32 : vector<8x128xi32> to vector<8x128xf32>
    %34 = arith.truncf %33 : vector<8x128xf32> to vector<8x128xbf16>
    %c0_19 = arith.constant 0 : index
    %c0_20 = arith.constant 0 : index
    %35 = vector.load %arg12[%c0_19, %c0_20] : memref<8x128xf32, #tpu.memory_space<vmem>>, vector<8x128xf32>
    %36 = arith.truncf %27 : vector<128x128xf32> to vector<128x128xbf16>
    %cst_21 = arith.constant dense<0.000000e+00> : vector<8x128xf32>
    %37 = tpu.matmul %34, %36, %cst_21 {dimension_numbers = #tpu.dot_dimension_numbers<[1], [0], [0], [1], [0, 0, 1, 1], [], []>} : vector<8x128xbf16>, vector<128x128xbf16>, vector<8x128xf32> -> vector<8x128xf32>
    %38 = arith.addf %35, %37 : vector<8x128xf32>
    %c0_22 = arith.constant 0 : index
    %c0_23 = arith.constant 0 : index
    %39 = vector.load %arg12[%c0_22, %c0_23] : memref<8x128xf32, #tpu.memory_space<vmem>>, vector<8x128xf32>
    tpu.vector_store %arg12[%c0_22, %c0_23], %38 {strides = array<i32>} : memref<8x128xf32, #tpu.memory_space<vmem>>, vector<8x128xf32>,
    %c0_i32_24 = arith.constant 0 : i32
    %40 = arith.cmpi eq, %arg0, %c0_i32_24 : i32
    %41 = arith.extui %40 : i1 to i32
    %c0_i32_25 = arith.constant 0 : i32
    %42 = arith.cmpi ne, %41, %c0_i32_25 : i32
    scf.if %42 {
      %c0_26 = arith.constant 0 : index
      %c0_27 = arith.constant 0 : index
      %43 = vector.load %arg12[%c0_26, %c0_27] : memref<8x128xf32, #tpu.memory_space<vmem>>, vector<8x128xf32>
      %44 = arith.truncf %43 : vector<8x128xf32> to vector<8x128xbf16>
      %c0_28 = arith.constant 0 : index
      %c0_29 = arith.constant 0 : index
      %45 = vector.load %arg7[%c0_28, %c0_29] : memref<128x128xbf16, #tpu.memory_space<vmem>>, vector<128x128xbf16>
      %cst_30 = arith.constant dense<0.000000e+00> : vector<8x128xf32>
      %46 = tpu.matmul %44, %45, %cst_30 {dimension_numbers = #tpu.dot_dimension_numbers<[1], [0], [0], [1], [0, 0, 1, 1], [], []>} : vector<8x128xbf16>, vector<128x128xbf16>, vector<8x128xf32> -> vector<8x128xf32>
      %c0_31 = arith.constant 0 : index
      %c0_32 = arith.constant 0 : index
      %47 = vector.load %arg8[%c0_31, %c0_32] : memref<1x128xf32, #tpu.memory_space<vmem>>, vector<1x128xf32>
      %48 = vector.broadcast %47 : vector<1x128xf32> to vector<8x128xf32>
      %49 = arith.addf %46, %48 : vector<8x128xf32>
      %cst_33 = arith.constant 0.000000e+00 : f32
      %50 = vector.broadcast %cst_33 : f32 to vector<8x128xf32>
      %51 = arith.maximumf %49, %50 : vector<8x128xf32>
      %52 = arith.truncf %51 : vector<8x128xf32> to vector<8x128xbf16>
      %c0_34 = arith.constant 0 : index
      %c0_35 = arith.constant 0 : index
      %53 = vector.load %arg9[%c0_34, %c0_35] : memref<128x128xbf16, #tpu.memory_space<vmem>>, vector<128x128xbf16>
      %cst_36 = arith.constant dense<0.000000e+00> : vector<8x128xf32>
      %54 = tpu.matmul %52, %53, %cst_36 {dimension_numbers = #tpu.dot_dimension_numbers<[1], [0], [0], [1], [0, 0, 1, 1], [], []>} : vector<8x128xbf16>, vector<128x128xbf16>, vector<8x128xf32> -> vector<8x128xf32>
      %c0_37 = arith.constant 0 : index
      %c0_38 = arith.constant 0 : index
      %55 = vector.load %arg10[%c0_37, %c0_38] : memref<1x128xf32, #tpu.memory_space<vmem>>, vector<1x128xf32>
      %56 = vector.broadcast %55 : vector<1x128xf32> to vector<8x128xf32>
      %57 = arith.addf %54, %56 : vector<8x128xf32>
      %cst_39 = arith.constant 0.000000e+00 : f32
      %58 = vector.broadcast %cst_39 : f32 to vector<8x128xf32>
      %59 = arith.maximumf %57, %58 : vector<8x128xf32>
      %c0_40 = arith.constant 0 : index
      %c0_41 = arith.constant 0 : index
      %60 = vector.load %arg11[%c0_40, %c0_41] : memref<8x128xf32, #tpu.memory_space<vmem>>, vector<8x128xf32>
      tpu.vector_store %arg11[%c0_40, %c0_41], %59 {strides = array<i32>} : memref<8x128xf32, #tpu.memory_space<vmem>>, vector<8x128xf32>,
    } else {
    }
    return
  }
  func.func @transform_0(%arg0: i32) -> (i32, i32) {
    %c0_i32 = arith.constant 0 : i32
    %c0_i32_0 = arith.constant 0 : i32
    return %c0_i32, %arg0 : i32, i32
  }
  func.func @transform_1(%arg0: i32) -> (i32, i32) {
    %c0_i32 = arith.constant 0 : i32
    %c0_i32_0 = arith.constant 0 : i32
    return %arg0, %c0_i32 : i32, i32
  }
  func.func @transform_2(%arg0: i32) -> (i32, i32) {
    %c0_i32 = arith.constant 0 : i32
    %c0_i32_0 = arith.constant 0 : i32
    %c0_i32_1 = arith.constant 0 : i32
    return %c0_i32, %c0_i32_0 : i32, i32
  }
  func.func @transform_3(%arg0: i32) -> (i32, i32) {
    %c0_i32 = arith.constant 0 : i32
    %c0_i32_0 = arith.constant 0 : i32
    %c0_i32_1 = arith.constant 0 : i32
    return %c0_i32, %c0_i32_0 : i32, i32
  }
  func.func @transform_4(%arg0: i32) -> (i32, i32) {
    %c0_i32 = arith.constant 0 : i32
    %c0_i32_0 = arith.constant 0 : i32
    %c0_i32_1 = arith.constant 0 : i32
    return %c0_i32, %c0_i32_0 : i32, i32
  }
  func.func @transform_5(%arg0: i32) -> (i32, i32) {
    %c0_i32 = arith.constant 0 : i32
    %c0_i32_0 = arith.constant 0 : i32
    %c0_i32_1 = arith.constant 0 : i32
    return %c0_i32, %c0_i32_0 : i32, i32
  }
  func.func @transform_6(%arg0: i32) -> (i32, i32) {
    %c0_i32 = arith.constant 0 : i32
    %c0_i32_0 = arith.constant 0 : i32
    %c0_i32_1 = arith.constant 0 : i32
    return %c0_i32, %c0_i32_0 : i32, i32
  }
  func.func @transform_7(%arg0: i32) -> (i32, i32) {
    %c0_i32 = arith.constant 0 : i32
    %c0_i32_0 = arith.constant 0 : i32
    %c0_i32_1 = arith.constant 0 : i32
    return %c0_i32, %c0_i32_0 : i32, i32
  }
  func.func @transform_8(%arg0: i32) -> (i32, i32) {
    %c0_i32 = arith.constant 0 : i32
    %c0_i32_0 = arith.constant 0 : i32
    %c0_i32_1 = arith.constant 0 : i32
    return %c0_i32, %c0_i32_0 : i32, i32
  }
  func.func @transform_9(%arg0: i32) -> (i32, i32) {
    %c0_i32 = arith.constant 0 : i32
    %c0_i32_0 = arith.constant 0 : i32
    %c0_i32_1 = arith.constant 0 : i32
    return %c0_i32, %c0_i32_0 : i32, i32
  }
  func.func @transform_10(%arg0: i32) -> (i32, i32) {
    %c0_i32 = arith.constant 0 : i32
    %c0_i32_0 = arith.constant 0 : i32
    %c0_i32_1 = arith.constant 0 : i32
    return %c0_i32, %c0_i32_0 : i32, i32
  }
}

module attributes {stable_mosaic.version = 11 : i64} {
  func.func @_gmn_aggregator_kernel(%arg0: i32, %arg1: memref<1x128xi32, #tpu.memory_space<vmem>>, %arg2: memref<128x128xbf16, #tpu.memory_space<vmem>>, %arg3: memref<128x256xbf16, #tpu.memory_space<vmem>>, %arg4: memref<1x256xf32, #tpu.memory_space<vmem>>, %arg5: memref<256x256xbf16, #tpu.memory_space<vmem>>, %arg6: memref<1x256xf32, #tpu.memory_space<vmem>>, %arg7: memref<128x128xbf16, #tpu.memory_space<vmem>>, %arg8: memref<1x128xf32, #tpu.memory_space<vmem>>, %arg9: memref<128x128xbf16, #tpu.memory_space<vmem>>, %arg10: memref<1x128xf32, #tpu.memory_space<vmem>>, %arg11: memref<8x128xf32, #tpu.memory_space<vmem>>, %arg12: memref<8x128xf32, #tpu.memory_space<vmem>>, %arg13: memref<8x128xi32, #tpu.memory_space<vmem>>) attributes {dimension_semantics = [#tpu.dimension_semantics<arbitrary>], iteration_bounds = array<i64: 1>, scalar_prefetch = 0 : i64, scratch_operands = 2 : i64, tpu.core_type = #tpu.core_type<tc>, window_params = [{transform_indices = @transform_0, window_bounds = array<i64: 1, 128>}, {transform_indices = @transform_1, window_bounds = array<i64: 128, 128>}, {pipeline_mode = #tpu.pipeline_mode<synchronous>, transform_indices = @transform_2, window_bounds = array<i64: 128, 256>}, {pipeline_mode = #tpu.pipeline_mode<synchronous>, transform_indices = @transform_3, window_bounds = array<i64: 1, 256>}, {pipeline_mode = #tpu.pipeline_mode<synchronous>, transform_indices = @transform_4, window_bounds = array<i64: 256, 256>}, {pipeline_mode = #tpu.pipeline_mode<synchronous>, transform_indices = @transform_5, window_bounds = array<i64: 1, 256>}, {pipeline_mode = #tpu.pipeline_mode<synchronous>, transform_indices = @transform_6, window_bounds = array<i64: 128, 128>}, {pipeline_mode = #tpu.pipeline_mode<synchronous>, transform_indices = @transform_7, window_bounds = array<i64: 1, 128>}, {pipeline_mode = #tpu.pipeline_mode<synchronous>, transform_indices = @transform_8, window_bounds = array<i64: 128, 128>}, {pipeline_mode = #tpu.pipeline_mode<synchronous>, transform_indices = @transform_9, window_bounds = array<i64: 1, 128>}, {pipeline_mode = #tpu.pipeline_mode<synchronous>, transform_indices = @transform_10, window_bounds = array<i64: 8, 128>}]} {
    %c0_i32 = arith.constant 0 : i32
    %0 = arith.cmpi eq, %arg0, %c0_i32 : i32
    %1 = arith.extui %0 : i1 to i32
    %c0_i32_0 = arith.constant 0 : i32
    %2 = arith.cmpi ne, %1, %c0_i32_0 : i32
    scf.if %2 {
      %cst_26 = arith.constant 0.000000e+00 : f32
      %43 = vector.broadcast %cst_26 : f32 to vector<8x128xf32>
      %c0_27 = arith.constant 0 : index
      %c0_28 = arith.constant 0 : index
      %44 = vector.load %arg12[%c0_27, %c0_28] : memref<8x128xf32, #tpu.memory_space<vmem>>, vector<8x128xf32>
      tpu.vector_store %arg12[%c0_27, %c0_28], %43 {strides = array<i32>} : memref<8x128xf32, #tpu.memory_space<vmem>>, vector<8x128xf32>,
      %45 = tpu.iota {dimensions = array<i32: 0>} : vector<8x128xi32>
      %c0_29 = arith.constant 0 : index
      %c0_30 = arith.constant 0 : index
      %46 = vector.load %arg13[%c0_29, %c0_30] : memref<8x128xi32, #tpu.memory_space<vmem>>, vector<8x128xi32>
      tpu.vector_store %arg13[%c0_29, %c0_30], %45 {strides = array<i32>} : memref<8x128xi32, #tpu.memory_space<vmem>>, vector<8x128xi32>,
    } else {
    }
    %c0 = arith.constant 0 : index
    %c0_1 = arith.constant 0 : index
    %3 = vector.load %arg2[%c0, %c0_1] : memref<128x128xbf16, #tpu.memory_space<vmem>>, vector<128x128xbf16>
    %c0_2 = arith.constant 0 : index
    %c0_3 = arith.constant 0 : index
    %4 = vector.load %arg3[%c0_2, %c0_3] : memref<128x256xbf16, #tpu.memory_space<vmem>>, vector<128x256xbf16>
    %cst = arith.constant dense<0.000000e+00> : vector<128x256xf32>
    %5 = tpu.matmul %3, %4, %cst {dimension_numbers = #tpu.dot_dimension_numbers<[1], [0], [0], [1], [0, 0, 1, 1], [], []>} : vector<128x128xbf16>, vector<128x256xbf16>, vector<128x256xf32> -> vector<128x256xf32>
    %c0_4 = arith.constant 0 : index
    %c0_5 = arith.constant 0 : index
    %6 = vector.load %arg4[%c0_4, %c0_5] : memref<1x256xf32, #tpu.memory_space<vmem>>, vector<1x256xf32>
    %7 = vector.broadcast %6 : vector<1x256xf32> to vector<128x256xf32>
    %8 = arith.addf %5, %7 : vector<128x256xf32>
    %cst_6 = arith.constant 0.000000e+00 : f32
    %9 = vector.broadcast %cst_6 : f32 to vector<128x256xf32>
    %10 = arith.maximumf %8, %9 : vector<128x256xf32>
    %11 = arith.truncf %10 : vector<128x256xf32> to vector<128x256xbf16>
    %c0_7 = arith.constant 0 : index
    %c0_8 = arith.constant 0 : index
    %12 = vector.load %arg5[%c0_7, %c0_8] : memref<256x256xbf16, #tpu.memory_space<vmem>>, vector<256x256xbf16>
    %cst_9 = arith.constant dense<0.000000e+00> : vector<128x256xf32>
    %13 = tpu.matmul %11, %12, %cst_9 {dimension_numbers = #tpu.dot_dimension_numbers<[1], [0], [0], [1], [0, 0, 1, 1], [], []>} : vector<128x256xbf16>, vector<256x256xbf16>, vector<128x256xf32> -> vector<128x256xf32>
    %c0_10 = arith.constant 0 : index
    %c0_11 = arith.constant 0 : index
    %14 = vector.load %arg6[%c0_10, %c0_11] : memref<1x256xf32, #tpu.memory_space<vmem>>, vector<1x256xf32>
    %15 = vector.broadcast %14 : vector<1x256xf32> to vector<128x256xf32>
    %16 = arith.addf %13, %15 : vector<128x256xf32>
    %cst_12 = arith.constant 0.000000e+00 : f32
    %17 = vector.broadcast %cst_12 : f32 to vector<128x256xf32>
    %18 = arith.maximumf %16, %17 : vector<128x256xf32>
    %19 = vector.extract_strided_slice %18 {offsets = [0, 0], sizes = [128, 128], strides = [1, 1]} : vector<128x256xf32> to vector<128x128xf32>
    %20 = vector.extract_strided_slice %18 {offsets = [0, 128], sizes = [128, 128], strides = [1, 1]} : vector<128x256xf32> to vector<128x128xf32>
    %cst_13 = arith.constant 0.000000e+00 : f32
    %21 = vector.broadcast %cst_13 : f32 to vector<128x128xf32>
    %22 = arith.subf %21, %20 : vector<128x128xf32>
    %23 = math.exp %22 : vector<128x128xf32>
    %cst_14 = arith.constant 1.000000e+00 : f32
    %24 = vector.broadcast %cst_14 : f32 to vector<128x128xf32>
    %25 = arith.addf %24, %23 : vector<128x128xf32>
    %26 = tpu.reciprocal %25 {approx = true} : vector<128x128xf32> -> vector<128x128xf32>
    %27 = arith.mulf %26, %19 : vector<128x128xf32>
    %c0_15 = arith.constant 0 : index
    %c0_16 = arith.constant 0 : index
    %28 = vector.load %arg13[%c0_15, %c0_16] : memref<8x128xi32, #tpu.memory_space<vmem>>, vector<8x128xi32>
    %c0_17 = arith.constant 0 : index
    %c0_18 = arith.constant 0 : index
    %29 = vector.load %arg1[%c0_17, %c0_18] : memref<1x128xi32, #tpu.memory_space<vmem>>, vector<1x128xi32>
    %30 = vector.broadcast %29 : vector<1x128xi32> to vector<8x128xi32>
    %31 = arith.cmpi eq, %28, %30 : vector<8x128xi32>
    %32 = arith.extui %31 : vector<8x128xi1> to vector<8x128xi32>
    %33 = arith.sitofp %32 : vector<8x128xi32> to vector<8x128xf32>
    %34 = arith.truncf %33 : vector<8x128xf32> to vector<8x128xbf16>
    %c0_19 = arith.constant 0 : index
    %c0_20 = arith.constant 0 : index
    %35 = vector.load %arg12[%c0_19, %c0_20] : memref<8x128xf32, #tpu.memory_space<vmem>>, vector<8x128xf32>
    %36 = arith.truncf %27 : vector<128x128xf32> to vector<128x128xbf16>
    %cst_21 = arith.constant dense<0.000000e+00> : vector<8x128xf32>
    %37 = tpu.matmul %34, %36, %cst_21 {dimension_numbers = #tpu.dot_dimension_numbers<[1], [0], [0], [1], [0, 0, 1, 1], [], []>} : vector<8x128xbf16>, vector<128x128xbf16>, vector<8x128xf32> -> vector<8x128xf32>
    %38 = arith.addf %35, %37 : vector<8x128xf32>
    %c0_22 = arith.constant 0 : index
    %c0_23 = arith.constant 0 : index
    %39 = vector.load %arg12[%c0_22, %c0_23] : memref<8x128xf32, #tpu.memory_space<vmem>>, vector<8x128xf32>
    tpu.vector_store %arg12[%c0_22, %c0_23], %38 {strides = array<i32>} : memref<8x128xf32, #tpu.memory_space<vmem>>, vector<8x128xf32>,
    %c0_i32_24 = arith.constant 0 : i32
    %40 = arith.cmpi eq, %arg0, %c0_i32_24 : i32
    %41 = arith.extui %40 : i1 to i32
    %c0_i32_25 = arith.constant 0 : i32
    %42 = arith.cmpi ne, %41, %c0_i32_25 : i32
    scf.if %42 {
      %c0_26 = arith.constant 0 : index
      %c0_27 = arith.constant 0 : index
      %43 = vector.load %arg12[%c0_26, %c0_27] : memref<8x128xf32, #tpu.memory_space<vmem>>, vector<8x128xf32>
      %44 = arith.truncf %43 : vector<8x128xf32> to vector<8x128xbf16>
      %c0_28 = arith.constant 0 : index
      %c0_29 = arith.constant 0 : index
      %45 = vector.load %arg7[%c0_28, %c0_29] : memref<128x128xbf16, #tpu.memory_space<vmem>>, vector<128x128xbf16>
      %cst_30 = arith.constant dense<0.000000e+00> : vector<8x128xf32>
      %46 = tpu.matmul %44, %45, %cst_30 {dimension_numbers = #tpu.dot_dimension_numbers<[1], [0], [0], [1], [0, 0, 1, 1], [], []>} : vector<8x128xbf16>, vector<128x128xbf16>, vector<8x128xf32> -> vector<8x128xf32>
      %c0_31 = arith.constant 0 : index
      %c0_32 = arith.constant 0 : index
      %47 = vector.load %arg8[%c0_31, %c0_32] : memref<1x128xf32, #tpu.memory_space<vmem>>, vector<1x128xf32>
      %48 = vector.broadcast %47 : vector<1x128xf32> to vector<8x128xf32>
      %49 = arith.addf %46, %48 : vector<8x128xf32>
      %cst_33 = arith.constant 0.000000e+00 : f32
      %50 = vector.broadcast %cst_33 : f32 to vector<8x128xf32>
      %51 = arith.maximumf %49, %50 : vector<8x128xf32>
      %52 = arith.truncf %51 : vector<8x128xf32> to vector<8x128xbf16>
      %c0_34 = arith.constant 0 : index
      %c0_35 = arith.constant 0 : index
      %53 = vector.load %arg9[%c0_34, %c0_35] : memref<128x128xbf16, #tpu.memory_space<vmem>>, vector<128x128xbf16>
      %cst_36 = arith.constant dense<0.000000e+00> : vector<8x128xf32>
      %54 = tpu.matmul %52, %53, %cst_36 {dimension_numbers = #tpu.dot_dimension_numbers<[1], [0], [0], [1], [0, 0, 1, 1], [], []>} : vector<8x128xbf16>, vector<128x128xbf16>, vector<8x128xf32> -> vector<8x128xf32>
      %c0_37 = arith.constant 0 : index
      %c0_38 = arith.constant 0 : index
      %55 = vector.load %arg10[%c0_37, %c0_38] : memref<1x128xf32, #tpu.memory_space<vmem>>, vector<1x128xf32>
      %56 = vector.broadcast %55 : vector<1x128xf32> to vector<8x128xf32>
      %57 = arith.addf %54, %56 : vector<8x128xf32>
      %cst_39 = arith.constant 0.000000e+00 : f32
      %58 = vector.broadcast %cst_39 : f32 to vector<8x128xf32>
      %59 = arith.maximumf %57, %58 : vector<8x128xf32>
      %c0_40 = arith.constant 0 : index
      %c0_41 = arith.constant 0 : index
      %60 = vector.load %arg11[%c0_40, %c0_41] : memref<8x128xf32, #tpu.memory_space<vmem>>, vector<8x128xf32>
      tpu.vector_store %arg11[%c0_40, %c0_41], %59 {strides = array<i32>} : memref<8x128xf32, #tpu.memory_space<vmem>>, vector<8x128xf32>,
    } else {
    }
    return
  }
  func.func @transform_0(%arg0: i32) -> (i32, i32) {
    %c0_i32 = arith.constant 0 : i32
    %c0_i32_0 = arith.constant 0 : i32
    return %c0_i32, %arg0 : i32, i32
  }
  func.func @transform_1(%arg0: i32) -> (i32, i32) {
    %c0_i32 = arith.constant 0 : i32
    %c0_i32_0 = arith.constant 0 : i32
    return %arg0, %c0_i32 : i32, i32
  }
  func.func @transform_2(%arg0: i32) -> (i32, i32) {
    %c0_i32 = arith.constant 0 : i32
    %c0_i32_0 = arith.constant 0 : i32
    %c0_i32_1 = arith.constant 0 : i32
    return %c0_i32, %c0_i32_0 : i32, i32
  }
  func.func @transform_3(%arg0: i32) -> (i32, i32) {
    %c0_i32 = arith.constant 0 : i32
    %c0_i32_0 = arith.constant 0 : i32
    %c0_i32_1 = arith.constant 0 : i32
    return %c0_i32, %c0_i32_0 : i32, i32
  }
  func.func @transform_4(%arg0: i32) -> (i32, i32) {
    %c0_i32 = arith.constant 0 : i32
    %c0_i32_0 = arith.constant 0 : i32
    %c0_i32_1 = arith.constant 0 : i32
    return %c0_i32, %c0_i32_0 : i32, i32
  }
  func.func @transform_5(%arg0: i32) -> (i32, i32) {
    %c0_i32 = arith.constant 0 : i32
    %c0_i32_0 = arith.constant 0 : i32
    %c0_i32_1 = arith.constant 0 : i32
    return %c0_i32, %c0_i32_0 : i32, i32
  }
  func.func @transform_6(%arg0: i32) -> (i32, i32) {
    %c0_i32 = arith.constant 0 : i32
    %c0_i32_0 = arith.constant 0 : i32
    %c0_i32_1 = arith.constant 0 : i32
    return %c0_i32, %c0_i32_0 : i32, i32
  }
  func.func @transform_7(%arg0: i32) -> (i32, i32) {
    %c0_i32 = arith.constant 0 : i32
    %c0_i32_0 = arith.constant 0 : i32
    %c0_i32_1 = arith.constant 0 : i32
    return %c0_i32, %c0_i32_0 : i32, i32
  }
  func.func @transform_8(%arg0: i32) -> (i32, i32) {
    %c0_i32 = arith.constant 0 : i32
    %c0_i32_0 = arith.constant 0 : i32
    %c0_i32_1 = arith.constant 0 : i32
    return %c0_i32, %c0_i32_0 : i32, i32
  }
  func.func @transform_9(%arg0: i32) -> (i32, i32) {
    %c0_i32 = arith.constant 0 : i32
    %c0_i32_0 = arith.constant 0 : i32
    %c0_i32_1 = arith.constant 0 : i32
    return %c0_i32, %c0_i32_0 : i32, i32
  }
  func.func @transform_10(%arg0: i32) -> (i32, i32) {
    %c0_i32 = arith.constant 0 : i32
    %c0_i32_0 = arith.constant 0 : i32
    %c0_i32_1 = arith.constant 0 : i32
    return %c0_i32, %c0_i32_0 : i32, i32
  }
}

</mosaic_0001>

<llo_original>
// kernel: tpu_custom_call.1
$region0: #{tpu_custom_call.1}
  #allocation0 [shape = 'u32[]', space=smem, size = 0x4, offset = 0x4, fixed_abs, tag = 'smem constant byte address 0x4 - core index']
  #allocation1 [shape = 'u32[144,128]{1,0:T(1,128)}', space=vmem, size = 0x12000, scoped, tag = 'internal scratch']
  #allocation2 [shape = 'f32[8,128]{1,0:T(8,128)}', space=vmem, size = 0x1000, scoped, tag = 'scratch operand']
  #allocation3 [shape = 's32[8,128]{1,0:T(8,128)}', space=vmem, size = 0x1000, scoped, tag = 'scratch operand']
  %s0 = inlined_call_operand.hbm [shape: s32[1,128], index: 0, kind: input, shape index: {}]
  %s1 = inlined_call_operand.hbm [shape: bf16[128,128], index: 1, kind: input, shape index: {}]
  %s2 = inlined_call_operand.hbm [shape: bf16[128,256], index: 2, kind: input, shape index: {}]
  %s3 = inlined_call_operand.vmem [shape: f32[1,256], index: 3, kind: input, shape index: {}]
  %s4 = inlined_call_operand.hbm [shape: bf16[256,256], index: 4, kind: input, shape index: {}]
  %s5 = inlined_call_operand.vmem [shape: f32[1,256], index: 5, kind: input, shape index: {}]
  %s6 = inlined_call_operand.hbm [shape: bf16[128,128], index: 6, kind: input, shape index: {}]
  %s7 = inlined_call_operand.vmem [shape: f32[1,128], index: 7, kind: input, shape index: {}]
  %s8 = inlined_call_operand.hbm [shape: bf16[128,128], index: 8, kind: input, shape index: {}]
  %s9 = inlined_call_operand.vmem [shape: f32[1,128], index: 9, kind: input, shape index: {}]
  %s10 = inlined_call_operand.hbm [shape: f32[8,128], index: 10, kind: output, shape index: {}]
  %s11 = sld [smem:[#allocation0]]
  $region82: #{tpu_custom_call.1} parent=0
    _
  %s13 = ssub.s32 1, %s11
  %s14 = scalar_select 0, %s13, %s11
  $region1: #{tpu_custom_call.1} parent=0
    #allocation4 [shape = 'u8[512]{0}', space=vmem, size = 0x400, scoped, tag = 'input window, operand 0, single buffered']
    #allocation5 [shape = 's32[1]{0}', space=sflag, size = 0x4, scoped, tag = 'scoped memory for tpu_custom_call.1']
    #allocation6 [shape = 's32[1]{0}', space=sflag, size = 0x4, scoped, tag = 'scoped memory for tpu_custom_call.1']
    #allocation7 [shape = 'u8[32768]{0}', space=vmem, size = 0x8000, scoped, tag = 'input window, operand 1, single buffered']
    #allocation8 [shape = 's32[1]{0}', space=sflag, size = 0x4, scoped, tag = 'scoped memory for tpu_custom_call.1']
    #allocation9 [shape = 'u8[65536]{0}', space=vmem, size = 0x10000, scoped, tag = 'input window, operand 2, single buffered']
    #allocation10 [shape = 'u8[131072]{0}', space=vmem, size = 0x20000, scoped, tag = 'input window, operand 4, single buffered']
    #allocation11 [shape = 's32[1]{0}', space=sflag, size = 0x4, scoped, tag = 'scoped memory for tpu_custom_call.1']
    #allocation12 [shape = 'u8[32768]{0}', space=vmem, size = 0x8000, scoped, tag = 'input window, operand 6, single buffered']
    #allocation13 [shape = 'u8[32768]{0}', space=vmem, size = 0x8000, scoped, tag = 'input window, operand 8, single buffered']
    #allocation14 [shape = 's32[1]{0}', space=sflag, size = 0x4, scoped, tag = 'scoped memory for tpu_custom_call.1']
    #allocation15 [shape = 'u8[4096]{0}', space=vmem, size = 0x1000, scoped, tag = 'output window, operand 0, single buffered']
    %15 = vsyncpa [#allocation5], 0
    %16 = vsyncpa [#allocation8], 0
    %17 = vsyncpa [#allocation11], 0
    %18 = vsyncpa [#allocation14], 0
    %19 = vsyncpa [#allocation6], 0
    // Predicated region
    $region2: #{tpu_custom_call.1} parent=1 // pred_check
      _
    $region3: #{tpu_custom_call.1} parent=1 // pred_check_branch
      %21 = sbr.rel (0) target = $region5
    $region4: #{tpu_custom_call.1} parent=1 // pred_region
      %s23 = ssub.s32 16, 16
      %24 = vsyncadd [#allocation5], %s23
      %s26 = sshll.u32 [#allocation4], 4
      %s27 = int_to_ptr.vmem [resolvable:$true] %s26
      %29 = dma.hbm_to_vmem [thread:$0]  %s0, 16, %s27, [#allocation5]
    $region5: #{tpu_custom_call.1} parent=1 // pred_fallthru
      _
    // Predicated region
    $region6: #{tpu_custom_call.1} parent=1 // pred_check
      _
    $region7: #{tpu_custom_call.1} parent=1 // pred_check_branch
      %31 = sbr.rel (0) target = $region9
    $region8: #{tpu_custom_call.1} parent=1 // pred_region
      %s33 = ssub.s32 1024, 1024
      %34 = vsyncadd [#allocation8], %s33
      %s35 = sshll.u32 [#allocation7], 4
      %s36 = int_to_ptr.vmem [resolvable:$true] %s35
      %41 = dma.hbm_to_vmem [thread:$0]  %s1, 1024, %s36, [#allocation8], 64, 64, 4
    $region9: #{tpu_custom_call.1} parent=1 // pred_fallthru
      _
    // Predicated region
    $region10: #{tpu_custom_call.1} parent=1 // pred_check
      _
    $region11: #{tpu_custom_call.1} parent=1 // pred_check_branch
      %43 = sbr.rel (0) target = $region13
    $region12: #{tpu_custom_call.1} parent=1 // pred_region
      %s45 = ssub.s32 2048, 2048
      %46 = vsyncadd [#allocation8], %s45
      %s47 = sshll.u32 [#allocation9], 4
      %s48 = int_to_ptr.vmem [resolvable:$true] %s47
      %53 = dma.hbm_to_vmem [thread:$0]  %s2, 2048, %s48, [#allocation8], 128, 128, 8
    $region13: #{tpu_custom_call.1} parent=1 // pred_fallthru
      _
    // Predicated region
    $region14: #{tpu_custom_call.1} parent=1 // pred_check
      _
    $region15: #{tpu_custom_call.1} parent=1 // pred_check_branch
      %55 = sbr.rel (0) target = $region17
    $region16: #{tpu_custom_call.1} parent=1 // pred_region
      _
    $region17: #{tpu_custom_call.1} parent=1 // pred_fallthru
      _
    // Predicated region
    $region18: #{tpu_custom_call.1} parent=1 // pred_check
      _
    $region19: #{tpu_custom_call.1} parent=1 // pred_check_branch
      %57 = sbr.rel (0) target = $region21
    $region20: #{tpu_custom_call.1} parent=1 // pred_region
      %s59 = ssub.s32 4096, 4096
      %60 = vsyncadd [#allocation11], %s59
      %s61 = sshll.u32 [#allocation10], 4
      %s62 = int_to_ptr.vmem [resolvable:$true] %s61
      %67 = dma.hbm_to_vmem [thread:$0]  %s4, 4096, %s62, [#allocation11], 128, 128, 8
    $region21: #{tpu_custom_call.1} parent=1 // pred_fallthru
      _
    // Predicated region
    $region22: #{tpu_custom_call.1} parent=1 // pred_check
      _
    $region23: #{tpu_custom_call.1} parent=1 // pred_check_branch
      %69 = sbr.rel (0) target = $region25
    $region24: #{tpu_custom_call.1} parent=1 // pred_region
      _
    $region25: #{tpu_custom_call.1} parent=1 // pred_fallthru
      _
    // Predicated region
    $region26: #{tpu_custom_call.1} parent=1 // pred_check
      _
    $region27: #{tpu_custom_call.1} parent=1 // pred_check_branch
      %71 = sbr.rel (0) target = $region29
    $region28: #{tpu_custom_call.1} parent=1 // pred_region
      %s73 = ssub.s32 1024, 1024
      %74 = vsyncadd [#allocation11], %s73
      %s75 = sshll.u32 [#allocation12], 4
      %s76 = int_to_ptr.vmem [resolvable:$true] %s75
      %81 = dma.hbm_to_vmem [thread:$0]  %s6, 1024, %s76, [#allocation11], 64, 64, 4
    $region29: #{tpu_custom_call.1} parent=1 // pred_fallthru
      _
    // Predicated region
    $region30: #{tpu_custom_call.1} parent=1 // pred_check
      _
    $region31: #{tpu_custom_call.1} parent=1 // pred_check_branch
      %83 = sbr.rel (0) target = $region33
    $region32: #{tpu_custom_call.1} parent=1 // pred_region
      _
    $region33: #{tpu_custom_call.1} parent=1 // pred_fallthru
      _
    // Predicated region
    $region34: #{tpu_custom_call.1} parent=1 // pred_check
      _
    $region35: #{tpu_custom_call.1} parent=1 // pred_check_branch
      %85 = sbr.rel (0) target = $region37
    $region36: #{tpu_custom_call.1} parent=1 // pred_region
      %s87 = ssub.s32 1024, 1024
      %88 = vsyncadd [#allocation14], %s87
      %s89 = sshll.u32 [#allocation13], 4
      %s90 = int_to_ptr.vmem [resolvable:$true] %s89
      %95 = dma.hbm_to_vmem [thread:$0]  %s8, 1024, %s90, [#allocation14], 64, 64, 4
    $region37: #{tpu_custom_call.1} parent=1 // pred_fallthru
      _
    // Predicated region
    $region38: #{tpu_custom_call.1} parent=1 // pred_check
      _
    $region39: #{tpu_custom_call.1} parent=1 // pred_check_branch
      %97 = sbr.rel (0) target = $region41
    $region40: #{tpu_custom_call.1} parent=1 // pred_region
      _
    $region41: #{tpu_custom_call.1} parent=1 // pred_fallthru
      _
    // Predicated region
    $region42: #{tpu_custom_call.1} parent=1 // pred_check
      _
    $region43: #{tpu_custom_call.1} parent=1 // pred_check_branch
      %99 = sbr.rel (0) target = $region45
    $region44: #{tpu_custom_call.1} parent=1 // pred_region
      %100 = dma.done [#allocation5], 16
    $region45: #{tpu_custom_call.1} parent=1 // pred_fallthru
      _
    // Predicated region
    $region46: #{tpu_custom_call.1} parent=1 // pred_check
      _
    $region47: #{tpu_custom_call.1} parent=1 // pred_check_branch
      %102 = sbr.rel (0) target = $region49
    $region48: #{tpu_custom_call.1} parent=1 // pred_region
      %103 = dma.done [#allocation8], 1024
    $region49: #{tpu_custom_call.1} parent=1 // pred_fallthru
      _
    // Predicated region
    $region50: #{tpu_custom_call.1} parent=1 // pred_check
      _
    $region51: #{tpu_custom_call.1} parent=1 // pred_check_branch
      %105 = sbr.rel (0) target = $region53
    $region52: #{tpu_custom_call.1} parent=1 // pred_region
      %106 = dma.done [#allocation8], 2048
    $region53: #{tpu_custom_call.1} parent=1 // pred_fallthru
      _
    // Predicated region
    $region54: #{tpu_custom_call.1} parent=1 // pred_check
      _
    $region55: #{tpu_custom_call.1} parent=1 // pred_check_branch
      %108 = sbr.rel (0) target = $region57
    $region56: #{tpu_custom_call.1} parent=1 // pred_region
      %109 = dma.done [#allocation11], 4096
    $region57: #{tpu_custom_call.1} parent=1 // pred_fallthru
      _
    // Predicated region
    $region58: #{tpu_custom_call.1} parent=1 // pred_check
      _
    $region59: #{tpu_custom_call.1} parent=1 // pred_check_branch
      %111 = sbr.rel (0) target = $region61
    $region60: #{tpu_custom_call.1} parent=1 // pred_region
      %112 = dma.done [#allocation11], 1024
    $region61: #{tpu_custom_call.1} parent=1 // pred_fallthru
      _
    // Predicated region
    $region62: #{tpu_custom_call.1} parent=1 // pred_check
      _
    $region63: #{tpu_custom_call.1} parent=1 // pred_check_branch
      %114 = sbr.rel (0) target = $region65
    $region64: #{tpu_custom_call.1} parent=1 // pred_region
      %115 = dma.done [#allocation14], 1024
    $region65: #{tpu_custom_call.1} parent=1 // pred_fallthru
      _
    %p117 = scmp.eq.s32.totalorder 0, 0
    // Predicated region
    $region66: #{tpu_custom_call.1} parent=1 // pred_check
      %p118 = pneg %p117
    $region67: #{tpu_custom_call.1} parent=1 // pred_check_branch
      %120 = sbr.rel (%p118) target = $region69
    $region68: #{tpu_custom_call.1} parent=1 // pred_region
      %121 = vst [vmem:[#allocation2] sm:$0xff] 0.0
      %v122 = vlaneseq
      %v123 = vshrl.u32 %v122, 7
      %124 = vst [vmem:[#allocation3] sm:$0xff] %v123
    $region69: #{tpu_custom_call.1} parent=1 // pred_fallthru
      _
    %v125 = vld [vmem:[#allocation7] sm:$0xf]
    %v126 = vld [vmem:[#allocation7 + $0x4] sm:$0xf]
    %v127 = vld [vmem:[#allocation7 + $0x8] sm:$0xf]
    %v128 = vld [vmem:[#allocation7 + $0xc] sm:$0xf]
    %v129 = vld [vmem:[#allocation7 + $0x10] sm:$0xf]
    %v130 = vld [vmem:[#allocation7 + $0x14] sm:$0xf]
    %v131 = vld [vmem:[#allocation7 + $0x18] sm:$0xf]
    %v132 = vld [vmem:[#allocation7 + $0x1c] sm:$0xf]
    %v133 = vld [vmem:[#allocation7 + $0x20] sm:$0xf]
    %v134 = vld [vmem:[#allocation7 + $0x24] sm:$0xf]
    %v135 = vld [vmem:[#allocation7 + $0x28] sm:$0xf]
    %v136 = vld [vmem:[#allocation7 + $0x2c] sm:$0xf]
    %v137 = vld [vmem:[#allocation7 + $0x30] sm:$0xf]
    %v138 = vld [vmem:[#allocation7 + $0x34] sm:$0xf]
    %v139 = vld [vmem:[#allocation7 + $0x38] sm:$0xf]
    %v140 = vld [vmem:[#allocation7 + $0x3c] sm:$0xf]
    %v141 = vld [vmem:[#allocation9] sm:$0xff]
    %v142 = vld [vmem:[#allocation9 + $0x8] sm:$0xff]
    %v143 = vld [vmem:[#allocation9 + $0x10] sm:$0xff]
    %v144 = vld [vmem:[#allocation9 + $0x18] sm:$0xff]
    %v145 = vld [vmem:[#allocation9 + $0x20] sm:$0xff]
    %v146 = vld [vmem:[#allocation9 + $0x28] sm:$0xff]
    %v147 = vld [vmem:[#allocation9 + $0x30] sm:$0xff]
    %v148 = vld [vmem:[#allocation9 + $0x38] sm:$0xff]
    %v149 = vld [vmem:[#allocation9 + $0x40] sm:$0xff]
    %v150 = vld [vmem:[#allocation9 + $0x48] sm:$0xff]
    %v151 = vld [vmem:[#allocation9 + $0x50] sm:$0xff]
    %v152 = vld [vmem:[#allocation9 + $0x58] sm:$0xff]
    %v153 = vld [vmem:[#allocation9 + $0x60] sm:$0xff]
    %v154 = vld [vmem:[#allocation9 + $0x68] sm:$0xff]
    %v155 = vld [vmem:[#allocation9 + $0x70] sm:$0xff]
    %v156 = vld [vmem:[#allocation9 + $0x78] sm:$0xff]
    %v157 = vld [vmem:[%s3] sm:$0x3]
    %v159 = vlaneseq
    %v160 = vshrl.u32 %v159, 7
    %v161 = vsub.s32 0, %v160
    %v162 = vrot.slane %v157, %v161
    %v163 = vlaneseq
    %v164 = vshrl.u32 %v163, 7
    %v165 = vsub.s32 1, %v164
    %v166 = vrot.slane %v157, %v165
    %v185 = vunpack.c.l.b16 %v125
    %v186 = vunpack.c.l.b16 %v126
    %v187 = vunpack.c.l.b16 %v127
    %v188 = vunpack.c.l.b16 %v128
    %v189 = vunpack.c.l.b16 %v129
    %v190 = vunpack.c.l.b16 %v130
    %v191 = vunpack.c.l.b16 %v131
    %v192 = vunpack.c.l.b16 %v132
    %v193 = vunpack.c.l.b16 %v133
    %v194 = vunpack.c.l.b16 %v134
    %v195 = vunpack.c.l.b16 %v135
    %v196 = vunpack.c.l.b16 %v136
    %v197 = vunpack.c.l.b16 %v137
    %v198 = vunpack.c.l.b16 %v138
    %v199 = vunpack.c.l.b16 %v139
    %v200 = vunpack.c.l.b16 %v140
    %v201 = vpack.c.b16 %v186, %v185
    %v202 = vpack.c.b16 %v188, %v187
    %v203 = vpack.c.b16 %v190, %v189
    %v204 = vpack.c.b16 %v192, %v191
    %v205 = vpack.c.b16 %v194, %v193
    %v206 = vpack.c.b16 %v196, %v195
    %v207 = vpack.c.b16 %v198, %v197
    %v208 = vpack.c.b16 %v200, %v199
    %v233 = vunpack.c.l.b16 %v141
    %v234 = vunpack.c.h.b16 %v141
    %v235 = vunpack.c.l.b16 %v142
    %v236 = vunpack.c.h.b16 %v142
    %v237 = vunpack.c.l.b16 %v143
    %v238 = vunpack.c.h.b16 %v143
    %v239 = vunpack.c.l.b16 %v144
    %v240 = vunpack.c.h.b16 %v144
    %v241 = vunpack.c.l.b16 %v145
    %v242 = vunpack.c.h.b16 %v145
    %v243 = vunpack.c.l.b16 %v146
    %v244 = vunpack.c.h.b16 %v146
    %v245 = vunpack.c.l.b16 %v147
    %v246 = vunpack.c.h.b16 %v147
    %v247 = vunpack.c.l.b16 %v148
    %v248 = vunpack.c.h.b16 %v148
    %v249 = vunpack.c.l.b16 %v149
    %v250 = vunpack.c.h.b16 %v149
    %v251 = vunpack.c.l.b16 %v150
    %v252 = vunpack.c.h.b16 %v150
    %v253 = vunpack.c.l.b16 %v151
    %v254 = vunpack.c.h.b16 %v151
    %v255 = vunpack.c.l.b16 %v152
    %v256 = vunpack.c.h.b16 %v152
    %v257 = vunpack.c.l.b16 %v153
    %v258 = vunpack.c.h.b16 %v153
    %v259 = vunpack.c.l.b16 %v154
    %v260 = vunpack.c.h.b16 %v154
    %v261 = vunpack.c.l.b16 %v155
    %v262 = vunpack.c.h.b16 %v155
    %v263 = vunpack.c.l.b16 %v156
    %v264 = vunpack.c.h.b16 %v156
    %v265 = vpack.c.b16 %v235, %v233
    %v266 = vpack.c.b16 %v236, %v234
    %v267 = vpack.c.b16 %v239, %v237
    %v268 = vpack.c.b16 %v240, %v238
    %v269 = vpack.c.b16 %v243, %v241
    %v270 = vpack.c.b16 %v244, %v242
    %v271 = vpack.c.b16 %v247, %v245
    %v272 = vpack.c.b16 %v248, %v246
    %v273 = vpack.c.b16 %v251, %v249
    %v274 = vpack.c.b16 %v252, %v250
    %v275 = vpack.c.b16 %v255, %v253
    %v276 = vpack.c.b16 %v256, %v254
    %v277 = vpack.c.b16 %v259, %v257
    %v278 = vpack.c.b16 %v260, %v258
    %v279 = vpack.c.b16 %v263, %v261
    %v280 = vpack.c.b16 %v264, %v262
    %297 = vmatprep.subr.bf16.mxu0 %v266
    %298 = vmatpush1.bf16.msra.mxu0 %v265
    %299 = vmatprep.subr.bf16.mxu0 %v268
    %300 = vmatpush1.bf16.msra.mxu0 %v267
    %301 = vmatprep.subr.bf16.mxu0 %v270
    %302 = vmatpush1.bf16.msra.mxu0 %v269
    %303 = vmatprep.subr.bf16.mxu0 %v272
    %304 = vmatpush1.bf16.msra.mxu0 %v271
    %305 = vmatprep.subr.bf16.mxu0 %v274
    %306 = vmatpush1.bf16.msra.mxu0 %v273
    %307 = vmatprep.subr.bf16.mxu0 %v276
    %308 = vmatpush1.bf16.msra.mxu0 %v275
    %309 = vmatprep.subr.bf16.mxu0 %v278
    %310 = vmatpush1.bf16.msra.mxu0 %v277
    %311 = vmatprep.subr.bf16.mxu0 %v280
    %312 = vmatpush1.bf16.msra.mxu0 %v279
    %313 = vmatprep.subr.bf16.mxu0 0
    %314 = vmatpush1.bf16.msra.mxu0 0
    %315 = vmatprep.subr.bf16.mxu0 0
    %316 = vmatpush1.bf16.msra.mxu0 0
    %317 = vmatprep.subr.bf16.mxu0 0
    %318 = vmatpush1.bf16.msra.mxu0 0
    %319 = vmatprep.subr.bf16.mxu0 0
    %320 = vmatpush1.bf16.msra.mxu0 0
    %321 = vmatprep.subr.bf16.mxu0 0
    %322 = vmatpush1.bf16.msra.mxu0 0
    %323 = vmatprep.subr.bf16.mxu0 0
    %324 = vmatpush1.bf16.msra.mxu0 0
    %325 = vmatprep.subr.bf16.mxu0 0
    %326 = vmatpush1.bf16.msra.mxu0 0
    %327 = vmatprep.subr.bf16.mxu0 0
    %328 = vmatpush1.bf16.msra.mxu0 0
    %329 = vmatprep.mubr.bf16.mxu0 0
    %330 = vmatmul.mubr.bf16.gmra.mrb[0].mxu0 %v201
    %v331 = vpop.f32.mrb[0].mxu0
    %v332 = vadd.f32 %v162, %v331
    %v333 = vpop.f32.mrb[0].mxu0
    %v334 = vadd.f32 %v166, %v333
    %v335 = vpop.f32.mrb[0].mxu0
    %v336 = vadd.f32 %v162, %v335
    %v337 = vpop.f32.mrb[0].mxu0
    %v338 = vadd.f32 %v166, %v337
    %339 = vmatprep.mubr.bf16.mxu0 0
    %340 = vmatmul.mubr.bf16.gmra.mrb[0].mxu0 %v202
    %v341 = vpop.f32.mrb[0].mxu0
    %v342 = vadd.f32 %v162, %v341
    %v343 = vpop.f32.mrb[0].mxu0
    %v344 = vadd.f32 %v166, %v343
    %v345 = vpop.f32.mrb[0].mxu0
    %v346 = vadd.f32 %v162, %v345
    %v347 = vpop.f32.mrb[0].mxu0
    %v348 = vadd.f32 %v166, %v347
    %349 = vmatprep.mubr.bf16.mxu0 0
    %350 = vmatmul.mubr.bf16.gmra.mrb[0].mxu0 %v203
    %v351 = vpop.f32.mrb[0].mxu0
    %v352 = vadd.f32 %v162, %v351
    %v353 = vpop.f32.mrb[0].mxu0
    %v354 = vadd.f32 %v166, %v353
    %v355 = vpop.f32.mrb[0].mxu0
    %v356 = vadd.f32 %v162, %v355
    %v357 = vpop.f32.mrb[0].mxu0
    %v358 = vadd.f32 %v166, %v357
    %359 = vmatprep.mubr.bf16.mxu0 0
    %360 = vmatmul.mubr.bf16.gmra.mrb[0].mxu0 %v204
    %v361 = vpop.f32.mrb[0].mxu0
    %v362 = vadd.f32 %v162, %v361
    %v363 = vpop.f32.mrb[0].mxu0
    %v364 = vadd.f32 %v166, %v363
    %v365 = vpop.f32.mrb[0].mxu0
    %v366 = vadd.f32 %v162, %v365
    %v367 = vpop.f32.mrb[0].mxu0
    %v368 = vadd.f32 %v166, %v367
    %369 = vmatprep.mubr.bf16.mxu0 0
    %370 = vmatmul.mubr.bf16.gmra.mrb[0].mxu0 %v205
    %v371 = vpop.f32.mrb[0].mxu0
    %v372 = vadd.f32 %v162, %v371
    %v373 = vpop.f32.mrb[0].mxu0
    %v374 = vadd.f32 %v166, %v373
    %v375 = vpop.f32.mrb[0].mxu0
    %v376 = vadd.f32 %v162, %v375
    %v377 = vpop.f32.mrb[0].mxu0
    %v378 = vadd.f32 %v166, %v377
    %379 = vmatprep.mubr.bf16.mxu0 0
    %380 = vmatmul.mubr.bf16.gmra.mrb[0].mxu0 %v206
    %v381 = vpop.f32.mrb[0].mxu0
    %v382 = vadd.f32 %v162, %v381
    %v383 = vpop.f32.mrb[0].mxu0
    %v384 = vadd.f32 %v166, %v383
    %v385 = vpop.f32.mrb[0].mxu0
    %v386 = vadd.f32 %v162, %v385
    %v387 = vpop.f32.mrb[0].mxu0
    %v388 = vadd.f32 %v166, %v387
    %389 = vmatprep.mubr.bf16.mxu0 0
    %390 = vmatmul.mubr.bf16.gmra.mrb[0].mxu0 %v207
    %v391 = vpop.f32.mrb[0].mxu0
    %v392 = vadd.f32 %v162, %v391
    %v393 = vpop.f32.mrb[0].mxu0
    %v394 = vadd.f32 %v166, %v393
    %v395 = vpop.f32.mrb[0].mxu0
    %v396 = vadd.f32 %v162, %v395
    %v397 = vpop.f32.mrb[0].mxu0
    %v398 = vadd.f32 %v166, %v397
    %399 = vmatprep.mubr.bf16.mxu0 0
    %400 = vmatmul.mubr.bf16.gmra.mrb[0].mxu0 %v208
    %v401 = vpop.f32.mrb[0].mxu0
    %v402 = vadd.f32 %v162, %v401
    %v403 = vpop.f32.mrb[0].mxu0
    %v404 = vadd.f32 %v166, %v403
    %v405 = vpop.f32.mrb[0].mxu0
    %v406 = vadd.f32 %v162, %v405
    %v407 = vpop.f32.mrb[0].mxu0
    %v408 = vadd.f32 %v166, %v407
    %409 = vdwg.mxu0
    %v410 = vmax.f32 %v332, 0.0
    %v411 = vmax.f32 %v334, 0.0
    %v412 = vmax.f32 %v336, 0.0
    %v413 = vmax.f32 %v338, 0.0
    %v414 = vmax.f32 %v342, 0.0
    %v415 = vmax.f32 %v344, 0.0
    %v416 = vmax.f32 %v346, 0.0
    %v417 = vmax.f32 %v348, 0.0
    %v418 = vmax.f32 %v352, 0.0
    %v419 = vmax.f32 %v354, 0.0
    %v420 = vmax.f32 %v356, 0.0
    %v421 = vmax.f32 %v358, 0.0
    %v422 = vmax.f32 %v362, 0.0
    %v423 = vmax.f32 %v364, 0.0
    %v424 = vmax.f32 %v366, 0.0
    %v425 = vmax.f32 %v368, 0.0
    %v426 = vmax.f32 %v372, 0.0
    %v427 = vmax.f32 %v374, 0.0
    %v428 = vmax.f32 %v376, 0.0
    %v429 = vmax.f32 %v378, 0.0
    %v430 = vmax.f32 %v382, 0.0
    %v431 = vmax.f32 %v384, 0.0
    %v432 = vmax.f32 %v386, 0.0
    %v433 = vmax.f32 %v388, 0.0
    %v434 = vmax.f32 %v392, 0.0
    %v435 = vmax.f32 %v394, 0.0
    %v436 = vmax.f32 %v396, 0.0
    %v437 = vmax.f32 %v398, 0.0
    %v438 = vmax.f32 %v402, 0.0
    %v439 = vmax.f32 %v404, 0.0
    %v440 = vmax.f32 %v406, 0.0
    %v441 = vmax.f32 %v408, 0.0
    %v442 = vpack.c.bf16 %v412, %v410
    %v443 = vpack.c.bf16 %v413, %v411
    %v444 = vpack.c.bf16 %v416, %v414
    %v445 = vpack.c.bf16 %v417, %v415
    %v446 = vpack.c.bf16 %v420, %v418
    %v447 = vpack.c.bf16 %v421, %v419
    %v448 = vpack.c.bf16 %v424, %v422
    %v449 = vpack.c.bf16 %v425, %v423
    %v450 = vpack.c.bf16 %v428, %v426
    %v451 = vpack.c.bf16 %v429, %v427
    %v452 = vpack.c.bf16 %v432, %v430
    %v453 = vpack.c.bf16 %v433, %v431
    %v454 = vpack.c.bf16 %v436, %v434
    %v455 = vpack.c.bf16 %v437, %v435
    %v456 = vpack.c.bf16 %v440, %v438
    %v457 = vpack.c.bf16 %v441, %v439
    %v458 = vld [vmem:[#allocation10] sm:$0xff]
    %v459 = vld [vmem:[#allocation10 + $0x8] sm:$0xff]
    %v460 = vld [vmem:[#allocation10 + $0x10] sm:$0xff]
    %v461 = vld [vmem:[#allocation10 + $0x18] sm:$0xff]
    %v462 = vld [vmem:[#allocation10 + $0x20] sm:$0xff]
    %v463 = vld [vmem:[#allocation10 + $0x28] sm:$0xff]
    %v464 = vld [vmem:[#allocation10 + $0x30] sm:$0xff]
    %v465 = vld [vmem:[#allocation10 + $0x38] sm:$0xff]
    %v466 = vld [vmem:[#allocation10 + $0x40] sm:$0xff]
    %v467 = vld [vmem:[#allocation10 + $0x48] sm:$0xff]
    %v468 = vld [vmem:[#allocation10 + $0x50] sm:$0xff]
    %v469 = vld [vmem:[#allocation10 + $0x58] sm:$0xff]
    %v470 = vld [vmem:[#allocation10 + $0x60] sm:$0xff]
    %v471 = vld [vmem:[#allocation10 + $0x68] sm:$0xff]
    %v472 = vld [vmem:[#allocation10 + $0x70] sm:$0xff]
    %v473 = vld [vmem:[#allocation10 + $0x78] sm:$0xff]
    %v474 = vld [vmem:[#allocation10 + $0x80] sm:$0xff]
    %v475 = vld [vmem:[#allocation10 + $0x88] sm:$0xff]
    %v476 = vld [vmem:[#allocation10 + $0x90] sm:$0xff]
    %v477 = vld [vmem:[#allocation10 + $0x98] sm:$0xff]
    %v478 = vld [vmem:[#allocation10 + $0xa0] sm:$0xff]
    %v479 = vld [vmem:[#allocation10 + $0xa8] sm:$0xff]
    %v480 = vld [vmem:[#allocation10 + $0xb0] sm:$0xff]
    %v481 = vld [vmem:[#allocation10 + $0xb8] sm:$0xff]
    %v482 = vld [vmem:[#allocation10 + $0xc0] sm:$0xff]
    %v483 = vld [vmem:[#allocation10 + $0xc8] sm:$0xff]
    %v484 = vld [vmem:[#allocation10 + $0xd0] sm:$0xff]
    %v485 = vld [vmem:[#allocation10 + $0xd8] sm:$0xff]
    %v486 = vld [vmem:[#allocation10 + $0xe0] sm:$0xff]
    %v487 = vld [vmem:[#allocation10 + $0xe8] sm:$0xff]
    %v488 = vld [vmem:[#allocation10 + $0xf0] sm:$0xff]
    %v489 = vld [vmem:[#allocation10 + $0xf8] sm:$0xff]
    %v490 = vld [vmem:[%s5] sm:$0x3]
    %v492 = vlaneseq
    %v493 = vshrl.u32 %v492, 7
    %v494 = vsub.s32 0, %v493
    %v495 = vrot.slane %v490, %v494
    %v496 = vlaneseq
    %v497 = vshrl.u32 %v496, 7
    %v498 = vsub.s32 1, %v497
    %v499 = vrot.slane %v490, %v498
    %v534 = vunpack.c.l.b16 %v458
    %v535 = vunpack.c.h.b16 %v458
    %v536 = vunpack.c.l.b16 %v459
    %v537 = vunpack.c.h.b16 %v459
    %v538 = vunpack.c.l.b16 %v460
    %v539 = vunpack.c.h.b16 %v460
    %v540 = vunpack.c.l.b16 %v461
    %v541 = vunpack.c.h.b16 %v461
    %v542 = vunpack.c.l.b16 %v462
    %v543 = vunpack.c.h.b16 %v462
    %v544 = vunpack.c.l.b16 %v463
    %v545 = vunpack.c.h.b16 %v463
    %v546 = vunpack.c.l.b16 %v464
    %v547 = vunpack.c.h.b16 %v464
    %v548 = vunpack.c.l.b16 %v465
    %v549 = vunpack.c.h.b16 %v465
    %v550 = vunpack.c.l.b16 %v466
    %v551 = vunpack.c.h.b16 %v466
    %v552 = vunpack.c.l.b16 %v467
    %v553 = vunpack.c.h.b16 %v467
    %v554 = vunpack.c.l.b16 %v468
    %v555 = vunpack.c.h.b16 %v468
    %v556 = vunpack.c.l.b16 %v469
    %v557 = vunpack.c.h.b16 %v469
    %v558 = vunpack.c.l.b16 %v470
    %v559 = vunpack.c.h.b16 %v470
    %v560 = vunpack.c.l.b16 %v471
    %v561 = vunpack.c.h.b16 %v471
    %v562 = vunpack.c.l.b16 %v472
    %v563 = vunpack.c.h.b16 %v472
    %v564 = vunpack.c.l.b16 %v473
    %v565 = vunpack.c.h.b16 %v473
    %v566 = vunpack.c.l.b16 %v474
    %v567 = vunpack.c.h.b16 %v474
    %v568 = vunpack.c.l.b16 %v475
    %v569 = vunpack.c.h.b16 %v475
    %v570 = vunpack.c.l.b16 %v476
    %v571 = vunpack.c.h.b16 %v476
    %v572 = vunpack.c.l.b16 %v477
    %v573 = vunpack.c.h.b16 %v477
    %v574 = vunpack.c.l.b16 %v478
    %v575 = vunpack.c.h.b16 %v478
    %v576 = vunpack.c.l.b16 %v479
    %v577 = vunpack.c.h.b16 %v479
    %v578 = vunpack.c.l.b16 %v480
    %v579 = vunpack.c.h.b16 %v480
    %v580 = vunpack.c.l.b16 %v481
    %v581 = vunpack.c.h.b16 %v481
    %v582 = vunpack.c.l.b16 %v482
    %v583 = vunpack.c.h.b16 %v482
    %v584 = vunpack.c.l.b16 %v483
    %v585 = vunpack.c.h.b16 %v483
    %v586 = vunpack.c.l.b16 %v484
    %v587 = vunpack.c.h.b16 %v484
    %v588 = vunpack.c.l.b16 %v485
    %v589 = vunpack.c.h.b16 %v485
    %v590 = vunpack.c.l.b16 %v486
    %v591 = vunpack.c.h.b16 %v486
    %v592 = vunpack.c.l.b16 %v487
    %v593 = vunpack.c.h.b16 %v487
    %v594 = vunpack.c.l.b16 %v488
    %v595 = vunpack.c.h.b16 %v488
    %v596 = vunpack.c.l.b16 %v489
    %v597 = vunpack.c.h.b16 %v489
    %v598 = vpack.c.b16 %v536, %v534
    %v599 = vpack.c.b16 %v537, %v535
    %v600 = vpack.c.b16 %v540, %v538
    %v601 = vpack.c.b16 %v541, %v539
    %v602 = vpack.c.b16 %v544, %v542
    %v603 = vpack.c.b16 %v545, %v543
    %v604 = vpack.c.b16 %v548, %v546
    %v605 = vpack.c.b16 %v549, %v547
    %v606 = vpack.c.b16 %v552, %v550
    %v607 = vpack.c.b16 %v553, %v551
    %v608 = vpack.c.b16 %v556, %v554
    %v609 = vpack.c.b16 %v557, %v555
    %v610 = vpack.c.b16 %v560, %v558
    %v611 = vpack.c.b16 %v561, %v559
    %v612 = vpack.c.b16 %v564, %v562
    %v613 = vpack.c.b16 %v565, %v563
    %v614 = vpack.c.b16 %v568, %v566
    %v615 = vpack.c.b16 %v569, %v567
    %v616 = vpack.c.b16 %v572, %v570
    %v617 = vpack.c.b16 %v573, %v571
    %v618 = vpack.c.b16 %v576, %v574
    %v619 = vpack.c.b16 %v577, %v575
    %v620 = vpack.c.b16 %v580, %v578
    %v621 = vpack.c.b16 %v581, %v579
    %v622 = vpack.c.b16 %v584, %v582
    %v623 = vpack.c.b16 %v585, %v583
    %v624 = vpack.c.b16 %v588, %v586
    %v625 = vpack.c.b16 %v589, %v587
    %v626 = vpack.c.b16 %v592, %v590
    %v627 = vpack.c.b16 %v593, %v591
    %v628 = vpack.c.b16 %v596, %v594
    %v629 = vpack.c.b16 %v597, %v595
    %662 = vmatprep.subr.bf16.mxu0 %v599
    %663 = vmatpush1.bf16.msra.mxu0 %v598
    %664 = vmatprep.subr.bf16.mxu0 %v601
    %665 = vmatpush1.bf16.msra.mxu0 %v600
    %666 = vmatprep.subr.bf16.mxu0 %v603
    %667 = vmatpush1.bf16.msra.mxu0 %v602
    %668 = vmatprep.subr.bf16.mxu0 %v605
    %669 = vmatpush1.bf16.msra.mxu0 %v604
    %670 = vmatprep.subr.bf16.mxu0 %v607
    %671 = vmatpush1.bf16.msra.mxu0 %v606
    %672 = vmatprep.subr.bf16.mxu0 %v609
    %673 = vmatpush1.bf16.msra.mxu0 %v608
    %674 = vmatprep.subr.bf16.mxu0 %v611
    %675 = vmatpush1.bf16.msra.mxu0 %v610
    %676 = vmatprep.subr.bf16.mxu0 %v613
    %677 = vmatpush1.bf16.msra.mxu0 %v612
    %678 = vmatprep.subr.bf16.mxu0 %v615
    %679 = vmatpush1.bf16.msra.mxu0 %v614
    %680 = vmatprep.subr.bf16.mxu0 %v617
    %681 = vmatpush1.bf16.msra.mxu0 %v616
    %682 = vmatprep.subr.bf16.mxu0 %v619
    %683 = vmatpush1.bf16.msra.mxu0 %v618
    %684 = vmatprep.subr.bf16.mxu0 %v621
    %685 = vmatpush1.bf16.msra.mxu0 %v620
    %686 = vmatprep.subr.bf16.mxu0 %v623
    %687 = vmatpush1.bf16.msra.mxu0 %v622
    %688 = vmatprep.subr.bf16.mxu0 %v625
    %689 = vmatpush1.bf16.msra.mxu0 %v624
    %690 = vmatprep.subr.bf16.mxu0 %v627
    %691 = vmatpush1.bf16.msra.mxu0 %v626
    %692 = vmatprep.subr.bf16.mxu0 %v629
    %693 = vmatpush1.bf16.msra.mxu0 %v628
    %694 = vmatprep.mubr.bf16.mxu0 %v443
    %695 = vmatmul.mubr.bf16.gmra.mrb[0].mxu0 %v442
    %v696 = vpop.f32.mrb[0].mxu0
    %v697 = vadd.f32 %v495, %v696
    %v698 = vpop.f32.mrb[0].mxu0
    %v699 = vadd.f32 %v499, %v698
    %v700 = vpop.f32.mrb[0].mxu0
    %v701 = vadd.f32 %v495, %v700
    %v702 = vpop.f32.mrb[0].mxu0
    %v703 = vadd.f32 %v499, %v702
    %704 = vmatprep.mubr.bf16.mxu0 %v445
    %705 = vmatmul.mubr.bf16.gmra.mrb[0].mxu0 %v444
    %v706 = vpop.f32.mrb[0].mxu0
    %v707 = vadd.f32 %v495, %v706
    %v708 = vpop.f32.mrb[0].mxu0
    %v709 = vadd.f32 %v499, %v708
    %v710 = vpop.f32.mrb[0].mxu0
    %v711 = vadd.f32 %v495, %v710
    %v712 = vpop.f32.mrb[0].mxu0
    %v713 = vadd.f32 %v499, %v712
    %714 = vmatprep.mubr.bf16.mxu0 %v447
    %715 = vmatmul.mubr.bf16.gmra.mrb[0].mxu0 %v446
    %v716 = vpop.f32.mrb[0].mxu0
    %v717 = vadd.f32 %v495, %v716
    %v718 = vpop.f32.mrb[0].mxu0
    %v719 = vadd.f32 %v499, %v718
    %v720 = vpop.f32.mrb[0].mxu0
    %v721 = vadd.f32 %v495, %v720
    %v722 = vpop.f32.mrb[0].mxu0
    %v723 = vadd.f32 %v499, %v722
    %724 = vmatprep.mubr.bf16.mxu0 %v449
    %725 = vmatmul.mubr.bf16.gmra.mrb[0].mxu0 %v448
    %v726 = vpop.f32.mrb[0].mxu0
    %v727 = vadd.f32 %v495, %v726
    %v728 = vpop.f32.mrb[0].mxu0
    %v729 = vadd.f32 %v499, %v728
    %v730 = vpop.f32.mrb[0].mxu0
    %v731 = vadd.f32 %v495, %v730
    %v732 = vpop.f32.mrb[0].mxu0
    %v733 = vadd.f32 %v499, %v732
    %734 = vmatprep.mubr.bf16.mxu0 %v451
    %735 = vmatmul.mubr.bf16.gmra.mrb[0].mxu0 %v450
    %v736 = vpop.f32.mrb[0].mxu0
    %v737 = vadd.f32 %v495, %v736
    %v738 = vpop.f32.mrb[0].mxu0
    %v739 = vadd.f32 %v499, %v738
    %v740 = vpop.f32.mrb[0].mxu0
    %v741 = vadd.f32 %v495, %v740
    %v742 = vpop.f32.mrb[0].mxu0
    %v743 = vadd.f32 %v499, %v742
    %744 = vmatprep.mubr.bf16.mxu0 %v453
    %745 = vmatmul.mubr.bf16.gmra.mrb[0].mxu0 %v452
    %v746 = vpop.f32.mrb[0].mxu0
    %v747 = vadd.f32 %v495, %v746
    %v748 = vpop.f32.mrb[0].mxu0
    %v749 = vadd.f32 %v499, %v748
    %v750 = vpop.f32.mrb[0].mxu0
    %v751 = vadd.f32 %v495, %v750
    %v752 = vpop.f32.mrb[0].mxu0
    %v753 = vadd.f32 %v499, %v752
    %754 = vmatprep.mubr.bf16.mxu0 %v455
    %755 = vmatmul.mubr.bf16.gmra.mrb[0].mxu0 %v454
    %v756 = vpop.f32.mrb[0].mxu0
    %v757 = vadd.f32 %v495, %v756
    %v758 = vpop.f32.mrb[0].mxu0
    %v759 = vadd.f32 %v499, %v758
    %v760 = vpop.f32.mrb[0].mxu0
    %v761 = vadd.f32 %v495, %v760
    %v762 = vpop.f32.mrb[0].mxu0
    %v763 = vadd.f32 %v499, %v762
    %764 = vmatprep.mubr.bf16.mxu0 %v457
    %765 = vmatmul.mubr.bf16.gmra.mrb[0].mxu0 %v456
    %v766 = vpop.f32.mrb[0].mxu0
    %v767 = vadd.f32 %v495, %v766
    %v768 = vpop.f32.mrb[0].mxu0
    %v769 = vadd.f32 %v499, %v768
    %v770 = vpop.f32.mrb[0].mxu0
    %v771 = vadd.f32 %v495, %v770
    %v772 = vpop.f32.mrb[0].mxu0
    %v773 = vadd.f32 %v499, %v772
    %774 = vdwg.mxu0
    %v775 = vmax.f32 %v697, 0.0
    %v776 = vmax.f32 %v699, 0.0
    %v777 = vmax.f32 %v701, 0.0
    %v778 = vmax.f32 %v703, 0.0
    %v779 = vmax.f32 %v707, 0.0
    %v780 = vmax.f32 %v709, 0.0
    %v781 = vmax.f32 %v711, 0.0
    %v782 = vmax.f32 %v713, 0.0
    %v783 = vmax.f32 %v717, 0.0
    %v784 = vmax.f32 %v719, 0.0
    %v785 = vmax.f32 %v721, 0.0
    %v786 = vmax.f32 %v723, 0.0
    %v787 = vmax.f32 %v727, 0.0
    %v788 = vmax.f32 %v729, 0.0
    %v789 = vmax.f32 %v731, 0.0
    %v790 = vmax.f32 %v733, 0.0
    %v791 = vmax.f32 %v737, 0.0
    %v792 = vmax.f32 %v739, 0.0
    %v793 = vmax.f32 %v741, 0.0
    %v794 = vmax.f32 %v743, 0.0
    %v795 = vmax.f32 %v747, 0.0
    %v796 = vmax.f32 %v749, 0.0
    %v797 = vmax.f32 %v751, 0.0
    %v798 = vmax.f32 %v753, 0.0
    %v799 = vmax.f32 %v757, 0.0
    %v800 = vmax.f32 %v759, 0.0
    %v801 = vmax.f32 %v761, 0.0
    %v802 = vmax.f32 %v763, 0.0
    %v803 = vmax.f32 %v767, 0.0
    %v804 = vmax.f32 %v769, 0.0
    %v805 = vmax.f32 %v771, 0.0
    %v806 = vmax.f32 %v773, 0.0
    %v807 = vsub.f32 0.0, %v776
    %v808 = vsub.f32 0.0, %v778
    %v809 = vsub.f32 0.0, %v780
    %v810 = vsub.f32 0.0, %v782
    %v811 = vsub.f32 0.0, %v784
    %v812 = vsub.f32 0.0, %v786
    %v813 = vsub.f32 0.0, %v788
    %v814 = vsub.f32 0.0, %v790
    %v815 = vsub.f32 0.0, %v792
    %v816 = vsub.f32 0.0, %v794
    %v817 = vsub.f32 0.0, %v796
    %v818 = vsub.f32 0.0, %v798
    %v819 = vsub.f32 0.0, %v800
    %v820 = vsub.f32 0.0, %v802
    %v821 = vsub.f32 0.0, %v804
    %v822 = vsub.f32 0.0, %v806
    %v823 = vmul.f32 %v807, 1.442695
    %v824 = vpow.pop %v823
    %v825 = vmul.f32 %v808, 1.442695
    %v826 = vpow.pop %v825
    %v827 = vmul.f32 %v809, 1.442695
    %v828 = vpow.pop %v827
    %v829 = vmul.f32 %v810, 1.442695
    %v830 = vpow.pop %v829
    %v831 = vmul.f32 %v811, 1.442695
    %v832 = vpow.pop %v831
    %v833 = vmul.f32 %v812, 1.442695
    %v834 = vpow.pop %v833
    %v835 = vmul.f32 %v813, 1.442695
    %v836 = vpow.pop %v835
    %v837 = vmul.f32 %v814, 1.442695
    %v838 = vpow.pop %v837
    %v839 = vmul.f32 %v815, 1.442695
    %v840 = vpow.pop %v839
    %v841 = vmul.f32 %v816, 1.442695
    %v842 = vpow.pop %v841
    %v843 = vmul.f32 %v817, 1.442695
    %v844 = vpow.pop %v843
    %v845 = vmul.f32 %v818, 1.442695
    %v846 = vpow.pop %v845
    %v847 = vmul.f32 %v819, 1.442695
    %v848 = vpow.pop %v847
    %v849 = vmul.f32 %v820, 1.442695
    %v850 = vpow.pop %v849
    %v851 = vmul.f32 %v821, 1.442695
    %v852 = vpow.pop %v851
    %v853 = vmul.f32 %v822, 1.442695
    %v854 = vpow.pop %v853
    %v855 = vadd.f32 %v824, 1.0
    %v856 = vadd.f32 %v826, 1.0
    %v857 = vadd.f32 %v828, 1.0
    %v858 = vadd.f32 %v830, 1.0
    %v859 = vadd.f32 %v832, 1.0
    %v860 = vadd.f32 %v834, 1.0
    %v861 = vadd.f32 %v836, 1.0
    %v862 = vadd.f32 %v838, 1.0
    %v863 = vadd.f32 %v840, 1.0
    %v864 = vadd.f32 %v842, 1.0
    %v865 = vadd.f32 %v844, 1.0
    %v866 = vadd.f32 %v846, 1.0
    %v867 = vadd.f32 %v848, 1.0
    %v868 = vadd.f32 %v850, 1.0
    %v869 = vadd.f32 %v852, 1.0
    %v870 = vadd.f32 %v854, 1.0
    %v871 = vrcp.pop %v855
    %v872 = vrcp.pop %v856
    %v873 = vrcp.pop %v857
    %v874 = vrcp.pop %v858
    %v875 = vrcp.pop %v859
    %v876 = vrcp.pop %v860
    %v877 = vrcp.pop %v861
    %v878 = vrcp.pop %v862
    %v879 = vrcp.pop %v863
    %v880 = vrcp.pop %v864
    %v881 = vrcp.pop %v865
    %v882 = vrcp.pop %v866
    %v883 = vrcp.pop %v867
    %v884 = vrcp.pop %v868
    %v885 = vrcp.pop %v869
    %v886 = vrcp.pop %v870
    %v887 = vmul.f32 %v871, %v775
    %v888 = vmul.f32 %v872, %v777
    %v889 = vmul.f32 %v873, %v779
    %v890 = vmul.f32 %v874, %v781
    %v891 = vmul.f32 %v875, %v783
    %v892 = vmul.f32 %v876, %v785
    %v893 = vmul.f32 %v877, %v787
    %v894 = vmul.f32 %v878, %v789
    %v895 = vmul.f32 %v879, %v791
    %v896 = vmul.f32 %v880, %v793
    %v897 = vmul.f32 %v881, %v795
    %v898 = vmul.f32 %v882, %v797
    %v899 = vmul.f32 %v883, %v799
    %v900 = vmul.f32 %v884, %v801
    %v901 = vmul.f32 %v885, %v803
    %v902 = vmul.f32 %v886, %v805
    %v903 = vld [vmem:[#allocation3] sm:$0xff]
    %v904 = vld [vmem:[#allocation4] sm:$0x1]
    %v905 = vlaneseq
    %v906 = vshrl.u32 %v905, 7
    %v907 = vsub.s32 0, %v906
    %v908 = vrot.slane %v904, %v907
    %vm909 = vcmp.eq.s32.totalorder %v903, %v908
    %v910 = vsel %vm909, 1, 0
    %v911 = vcvt.s32.f32 %v910
    %v912 = vpack.c.bf16 %v911, %v911
    %v913 = vld [vmem:[#allocation2] sm:$0xff]
    %v914 = vpack.c.bf16 %v888, %v887
    %v915 = vpack.c.bf16 %v890, %v889
    %v916 = vpack.c.bf16 %v892, %v891
    %v917 = vpack.c.bf16 %v894, %v893
    %v918 = vpack.c.bf16 %v896, %v895
    %v919 = vpack.c.bf16 %v898, %v897
    %v920 = vpack.c.bf16 %v900, %v899
    %v921 = vpack.c.bf16 %v902, %v901
    %922 = vmatprep.subr.bf16.mxu0 0
    %923 = vmatpush1.bf16.msra.mxu0 %v914
    %924 = vmatprep.subr.bf16.mxu0 0
    %925 = vmatpush1.bf16.msra.mxu0 %v915
    %926 = vmatprep.subr.bf16.mxu0 0
    %927 = vmatpush1.bf16.msra.mxu0 %v916
    %928 = vmatprep.subr.bf16.mxu0 0
    %929 = vmatpush1.bf16.msra.mxu0 %v917
    %930 = vmatprep.subr.bf16.mxu0 0
    %931 = vmatpush1.bf16.msra.mxu0 %v918
    %932 = vmatprep.subr.bf16.mxu0 0
    %933 = vmatpush1.bf16.msra.mxu0 %v919
    %934 = vmatprep.subr.bf16.mxu0 0
    %935 = vmatpush1.bf16.msra.mxu0 %v920
    %936 = vmatprep.subr.bf16.mxu0 0
    %937 = vmatpush1.bf16.msra.mxu0 %v921
    %938 = vmatprep.subr.bf16.mxu0 0
    %939 = vmatpush1.bf16.msra.mxu0 0
    %940 = vmatprep.subr.bf16.mxu0 0
    %941 = vmatpush1.bf16.msra.mxu0 0
    %942 = vmatprep.subr.bf16.mxu0 0
    %943 = vmatpush1.bf16.msra.mxu0 0
    %944 = vmatprep.subr.bf16.mxu0 0
    %945 = vmatpush1.bf16.msra.mxu0 0
    %946 = vmatprep.subr.bf16.mxu0 0
    %947 = vmatpush1.bf16.msra.mxu0 0
    %948 = vmatprep.subr.bf16.mxu0 0
    %949 = vmatpush1.bf16.msra.mxu0 0
    %950 = vmatprep.subr.bf16.mxu0 0
    %951 = vmatpush1.bf16.msra.mxu0 0
    %952 = vmatprep.subr.bf16.mxu0 0
    %953 = vmatpush1.bf16.msra.mxu0 0
    %954 = vmatprep.mubr.bf16.mxu0 0
    %955 = vmatmul.mubr.bf16.gmra.mrb[0].mxu0 %v912
    %v956 = vpop.f32.mrb[0].mxu0
    %v957 = vadd.f32 0.0, %v956
    %v958 = vpop.f32.mrb[0].mxu0
    %v959 = vpop.f32.mrb[0].mxu0
    %v960 = vpop.f32.mrb[0].mxu0
    %961 = vdwg.mxu0
    %v962 = vadd.f32 %v913, %v957
    %963 = vst [vmem:[#allocation2] sm:$0xff] %v962
    // Predicated region
    $region70: #{tpu_custom_call.1} parent=1 // pred_check
      %p964 = pneg %p117
    $region71: #{tpu_custom_call.1} parent=1 // pred_check_branch
      %966 = sbr.rel (%p964) target = $region73
    $region72: #{tpu_custom_call.1} parent=1 // pred_region
      %v967 = vld [vmem:[#allocation2] sm:$0xff]
      %v968 = vpack.c.bf16 %v967, %v967
      %v969 = vld [vmem:[#allocation12] sm:$0xf]
      %v970 = vld [vmem:[#allocation12 + $0x4] sm:$0xf]
      %v971 = vld [vmem:[#allocation12 + $0x8] sm:$0xf]
      %v972 = vld [vmem:[#allocation12 + $0xc] sm:$0xf]
      %v973 = vld [vmem:[#allocation12 + $0x10] sm:$0xf]
      %v974 = vld [vmem:[#allocation12 + $0x14] sm:$0xf]
      %v975 = vld [vmem:[#allocation12 + $0x18] sm:$0xf]
      %v976 = vld [vmem:[#allocation12 + $0x1c] sm:$0xf]
      %v977 = vld [vmem:[#allocation12 + $0x20] sm:$0xf]
      %v978 = vld [vmem:[#allocation12 + $0x24] sm:$0xf]
      %v979 = vld [vmem:[#allocation12 + $0x28] sm:$0xf]
      %v980 = vld [vmem:[#allocation12 + $0x2c] sm:$0xf]
      %v981 = vld [vmem:[#allocation12 + $0x30] sm:$0xf]
      %v982 = vld [vmem:[#allocation12 + $0x34] sm:$0xf]
      %v983 = vld [vmem:[#allocation12 + $0x38] sm:$0xf]
      %v984 = vld [vmem:[#allocation12 + $0x3c] sm:$0xf]
      %v985 = vld [vmem:[%s7] sm:$0x1]
      %v987 = vlaneseq
      %v988 = vshrl.u32 %v987, 7
      %v989 = vsub.s32 0, %v988
      %v990 = vrot.slane %v985, %v989
      %v1008 = vunpack.c.l.b16 %v969
      %v1009 = vunpack.c.l.b16 %v970
      %v1010 = vunpack.c.l.b16 %v971
      %v1011 = vunpack.c.l.b16 %v972
      %v1012 = vunpack.c.l.b16 %v973
      %v1013 = vunpack.c.l.b16 %v974
      %v1014 = vunpack.c.l.b16 %v975
      %v1015 = vunpack.c.l.b16 %v976
      %v1016 = vunpack.c.l.b16 %v977
      %v1017 = vunpack.c.l.b16 %v978
      %v1018 = vunpack.c.l.b16 %v979
      %v1019 = vunpack.c.l.b16 %v980
      %v1020 = vunpack.c.l.b16 %v981
      %v1021 = vunpack.c.l.b16 %v982
      %v1022 = vunpack.c.l.b16 %v983
      %v1023 = vunpack.c.l.b16 %v984
      %v1024 = vpack.c.b16 %v1009, %v1008
      %v1025 = vpack.c.b16 %v1011, %v1010
      %v1026 = vpack.c.b16 %v1013, %v1012
      %v1027 = vpack.c.b16 %v1015, %v1014
      %v1028 = vpack.c.b16 %v1017, %v1016
      %v1029 = vpack.c.b16 %v1019, %v1018
      %v1030 = vpack.c.b16 %v1021, %v1020
      %v1031 = vpack.c.b16 %v1023, %v1022
      %1040 = vmatprep.subr.bf16.mxu0 0
      %1041 = vmatpush1.bf16.msra.mxu0 %v1024
      %1042 = vmatprep.subr.bf16.mxu0 0
      %1043 = vmatpush1.bf16.msra.mxu0 %v1025
      %1044 = vmatprep.subr.bf16.mxu0 0
      %1045 = vmatpush1.bf16.msra.mxu0 %v1026
      %1046 = vmatprep.subr.bf16.mxu0 0
      %1047 = vmatpush1.bf16.msra.mxu0 %v1027
      %1048 = vmatprep.subr.bf16.mxu0 0
      %1049 = vmatpush1.bf16.msra.mxu0 %v1028
      %1050 = vmatprep.subr.bf16.mxu0 0
      %1051 = vmatpush1.bf16.msra.mxu0 %v1029
      %1052 = vmatprep.subr.bf16.mxu0 0
      %1053 = vmatpush1.bf16.msra.mxu0 %v1030
      %1054 = vmatprep.subr.bf16.mxu0 0
      %1055 = vmatpush1.bf16.msra.mxu0 %v1031
      %1056 = vmatprep.subr.bf16.mxu0 0
      %1057 = vmatpush1.bf16.msra.mxu0 0
      %1058 = vmatprep.subr.bf16.mxu0 0
      %1059 = vmatpush1.bf16.msra.mxu0 0
      %1060 = vmatprep.subr.bf16.mxu0 0
      %1061 = vmatpush1.bf16.msra.mxu0 0
      %1062 = vmatprep.subr.bf16.mxu0 0
      %1063 = vmatpush1.bf16.msra.mxu0 0
      %1064 = vmatprep.subr.bf16.mxu0 0
      %1065 = vmatpush1.bf16.msra.mxu0 0
      %1066 = vmatprep.subr.bf16.mxu0 0
      %1067 = vmatpush1.bf16.msra.mxu0 0
      %1068 = vmatprep.subr.bf16.mxu0 0
      %1069 = vmatpush1.bf16.msra.mxu0 0
      %1070 = vmatprep.subr.bf16.mxu0 0
      %1071 = vmatpush1.bf16.msra.mxu0 0
      %1072 = vmatprep.mubr.bf16.mxu0 0
      %1073 = vmatmul.mubr.bf16.gmra.mrb[0].mxu0 %v968
      %v1074 = vpop.f32.mrb[0].mxu0
      %v1075 = vadd.f32 %v990, %v1074
      %v1076 = vpop.f32.mrb[0].mxu0
      %v1077 = vpop.f32.mrb[0].mxu0
      %v1078 = vpop.f32.mrb[0].mxu0
      %1079 = vdwg.mxu0
      %v1080 = vmax.f32 %v1075, 0.0
      %v1081 = vpack.c.bf16 %v1080, %v1080
      %v1082 = vld [vmem:[#allocation13] sm:$0xf]
      %v1083 = vld [vmem:[#allocation13 + $0x4] sm:$0xf]
      %v1084 = vld [vmem:[#allocation13 + $0x8] sm:$0xf]
      %v1085 = vld [vmem:[#allocation13 + $0xc] sm:$0xf]
      %v1086 = vld [vmem:[#allocation13 + $0x10] sm:$0xf]
      %v1087 = vld [vmem:[#allocation13 + $0x14] sm:$0xf]
      %v1088 = vld [vmem:[#allocation13 + $0x18] sm:$0xf]
      %v1089 = vld [vmem:[#allocation13 + $0x1c] sm:$0xf]
      %v1090 = vld [vmem:[#allocation13 + $0x20] sm:$0xf]
      %v1091 = vld [vmem:[#allocation13 + $0x24] sm:$0xf]
      %v1092 = vld [vmem:[#allocation13 + $0x28] sm:$0xf]
      %v1093 = vld [vmem:[#allocation13 + $0x2c] sm:$0xf]
      %v1094 = vld [vmem:[#allocation13 + $0x30] sm:$0xf]
      %v1095 = vld [vmem:[#allocation13 + $0x34] sm:$0xf]
      %v1096 = vld [vmem:[#allocation13 + $0x38] sm:$0xf]
      %v1097 = vld [vmem:[#allocation13 + $0x3c] sm:$0xf]
      %v1098 = vld [vmem:[%s9] sm:$0x1]
      %v1100 = vlaneseq
      %v1101 = vshrl.u32 %v1100, 7
      %v1102 = vsub.s32 0, %v1101
      %v1103 = vrot.slane %v1098, %v1102
      %v1121 = vunpack.c.l.b16 %v1082
      %v1122 = vunpack.c.l.b16 %v1083
      %v1123 = vunpack.c.l.b16 %v1084
      %v1124 = vunpack.c.l.b16 %v1085
      %v1125 = vunpack.c.l.b16 %v1086
      %v1126 = vunpack.c.l.b16 %v1087
      %v1127 = vunpack.c.l.b16 %v1088
      %v1128 = vunpack.c.l.b16 %v1089
      %v1129 = vunpack.c.l.b16 %v1090
      %v1130 = vunpack.c.l.b16 %v1091
      %v1131 = vunpack.c.l.b16 %v1092
      %v1132 = vunpack.c.l.b16 %v1093
      %v1133 = vunpack.c.l.b16 %v1094
      %v1134 = vunpack.c.l.b16 %v1095
      %v1135 = vunpack.c.l.b16 %v1096
      %v1136 = vunpack.c.l.b16 %v1097
      %v1137 = vpack.c.b16 %v1122, %v1121
      %v1138 = vpack.c.b16 %v1124, %v1123
      %v1139 = vpack.c.b16 %v1126, %v1125
      %v1140 = vpack.c.b16 %v1128, %v1127
      %v1141 = vpack.c.b16 %v1130, %v1129
      %v1142 = vpack.c.b16 %v1132, %v1131
      %v1143 = vpack.c.b16 %v1134, %v1133
      %v1144 = vpack.c.b16 %v1136, %v1135
      %1153 = vmatprep.subr.bf16.mxu0 0
      %1154 = vmatpush1.bf16.msra.mxu0 %v1137
      %1155 = vmatprep.subr.bf16.mxu0 0
      %1156 = vmatpush1.bf16.msra.mxu0 %v1138
      %1157 = vmatprep.subr.bf16.mxu0 0
      %1158 = vmatpush1.bf16.msra.mxu0 %v1139
      %1159 = vmatprep.subr.bf16.mxu0 0
      %1160 = vmatpush1.bf16.msra.mxu0 %v1140
      %1161 = vmatprep.subr.bf16.mxu0 0
      %1162 = vmatpush1.bf16.msra.mxu0 %v1141
      %1163 = vmatprep.subr.bf16.mxu0 0
      %1164 = vmatpush1.bf16.msra.mxu0 %v1142
      %1165 = vmatprep.subr.bf16.mxu0 0
      %1166 = vmatpush1.bf16.msra.mxu0 %v1143
      %1167 = vmatprep.subr.bf16.mxu0 0
      %1168 = vmatpush1.bf16.msra.mxu0 %v1144
      %1169 = vmatprep.subr.bf16.mxu0 0
      %1170 = vmatpush1.bf16.msra.mxu0 0
      %1171 = vmatprep.subr.bf16.mxu0 0
      %1172 = vmatpush1.bf16.msra.mxu0 0
      %1173 = vmatprep.subr.bf16.mxu0 0
      %1174 = vmatpush1.bf16.msra.mxu0 0
      %1175 = vmatprep.subr.bf16.mxu0 0
      %1176 = vmatpush1.bf16.msra.mxu0 0
      %1177 = vmatprep.subr.bf16.mxu0 0
      %1178 = vmatpush1.bf16.msra.mxu0 0
      %1179 = vmatprep.subr.bf16.mxu0 0
      %1180 = vmatpush1.bf16.msra.mxu0 0
      %1181 = vmatprep.subr.bf16.mxu0 0
      %1182 = vmatpush1.bf16.msra.mxu0 0
      %1183 = vmatprep.subr.bf16.mxu0 0
      %1184 = vmatpush1.bf16.msra.mxu0 0
      %1185 = vmatprep.mubr.bf16.mxu0 0
      %1186 = vmatmul.mubr.bf16.gmra.mrb[0].mxu0 %v1081
      %v1187 = vpop.f32.mrb[0].mxu0
      %v1188 = vadd.f32 %v1103, %v1187
      %v1189 = vpop.f32.mrb[0].mxu0
      %v1190 = vpop.f32.mrb[0].mxu0
      %v1191 = vpop.f32.mrb[0].mxu0
      %1192 = vdwg.mxu0
      %v1193 = vmax.f32 %v1188, 0.0
      %1194 = vst [vmem:[#allocation15] sm:$0xff] %v1193
    $region73: #{tpu_custom_call.1} parent=1 // pred_fallthru
      _
    // Predicated region
    $region74: #{tpu_custom_call.1} parent=1 // pred_check
      _
    $region75: #{tpu_custom_call.1} parent=1 // pred_check_branch
      %1196 = sbr.rel (0) target = $region77
    $region76: #{tpu_custom_call.1} parent=1 // pred_region
      %s1198 = ssub.s32 128, 128
      %1199 = vsyncadd [#allocation6], %s1198
      %s1201 = sshll.u32 [#allocation15], 4
      %s1202 = int_to_ptr.vmem [resolvable:$true] %s1201
      %1204 = dma.vmem_to_hbm [thread:$0]  %s1202, 128, %s10, [#allocation6]
    $region77: #{tpu_custom_call.1} parent=1 // pred_fallthru
      _
    // Predicated region
    $region78: #{tpu_custom_call.1} parent=1 // pred_check
      _
    $region79: #{tpu_custom_call.1} parent=1 // pred_check_branch
      %1206 = sbr.rel (0) target = $region81
    $region80: #{tpu_custom_call.1} parent=1 // pred_region
      %1207 = dma.done [#allocation6], 128
    $region81: #{tpu_custom_call.1} parent=1 // pred_fallthru
      _
    %1208 = vsyncpa [#allocation5], 1
    %1209 = vsyncpa [#allocation8], 1
    %1210 = vsyncpa [#allocation11], 1
    %1211 = vsyncpa [#allocation14], 1
    %1212 = vsyncpa [#allocation6], 1

// kernel: tpu_custom_call.1
$region0: #{tpu_custom_call.1}
  #allocation0 [shape = 'u32[]', space=smem, size = 0x4, offset = 0x4, fixed_abs, tag = 'smem constant byte address 0x4 - core index']
  #allocation1 [shape = 'u32[144,128]{1,0:T(1,128)}', space=vmem, size = 0x12000, scoped, tag = 'internal scratch']
  #allocation2 [shape = 'f32[8,128]{1,0:T(8,128)}', space=vmem, size = 0x1000, scoped, tag = 'scratch operand']
  #allocation3 [shape = 's32[8,128]{1,0:T(8,128)}', space=vmem, size = 0x1000, scoped, tag = 'scratch operand']
  %s0 = inlined_call_operand.hbm [shape: s32[1,128], index: 0, kind: input, shape index: {}]
  %s1 = inlined_call_operand.hbm [shape: bf16[128,128], index: 1, kind: input, shape index: {}]
  %s2 = inlined_call_operand.hbm [shape: bf16[128,256], index: 2, kind: input, shape index: {}]
  %s3 = inlined_call_operand.vmem [shape: f32[1,256], index: 3, kind: input, shape index: {}]
  %s4 = inlined_call_operand.hbm [shape: bf16[256,256], index: 4, kind: input, shape index: {}]
  %s5 = inlined_call_operand.vmem [shape: f32[1,256], index: 5, kind: input, shape index: {}]
  %s6 = inlined_call_operand.hbm [shape: bf16[128,128], index: 6, kind: input, shape index: {}]
  %s7 = inlined_call_operand.vmem [shape: f32[1,128], index: 7, kind: input, shape index: {}]
  %s8 = inlined_call_operand.hbm [shape: bf16[128,128], index: 8, kind: input, shape index: {}]
  %s9 = inlined_call_operand.vmem [shape: f32[1,128], index: 9, kind: input, shape index: {}]
  %s10 = inlined_call_operand.hbm [shape: f32[8,128], index: 10, kind: output, shape index: {}]
  %s11 = sld [smem:[#allocation0]]
  $region82: #{tpu_custom_call.1} parent=0
    _
  %s13 = ssub.s32 1, %s11
  %s14 = scalar_select 0, %s13, %s11
  $region1: #{tpu_custom_call.1} parent=0
    #allocation4 [shape = 'u8[512]{0}', space=vmem, size = 0x400, scoped, tag = 'input window, operand 0, single buffered']
    #allocation5 [shape = 's32[1]{0}', space=sflag, size = 0x4, scoped, tag = 'scoped memory for tpu_custom_call.1']
    #allocation6 [shape = 's32[1]{0}', space=sflag, size = 0x4, scoped, tag = 'scoped memory for tpu_custom_call.1']
    #allocation7 [shape = 'u8[32768]{0}', space=vmem, size = 0x8000, scoped, tag = 'input window, operand 1, single buffered']
    #allocation8 [shape = 's32[1]{0}', space=sflag, size = 0x4, scoped, tag = 'scoped memory for tpu_custom_call.1']
    #allocation9 [shape = 'u8[65536]{0}', space=vmem, size = 0x10000, scoped, tag = 'input window, operand 2, single buffered']
    #allocation10 [shape = 'u8[131072]{0}', space=vmem, size = 0x20000, scoped, tag = 'input window, operand 4, single buffered']
    #allocation11 [shape = 's32[1]{0}', space=sflag, size = 0x4, scoped, tag = 'scoped memory for tpu_custom_call.1']
    #allocation12 [shape = 'u8[32768]{0}', space=vmem, size = 0x8000, scoped, tag = 'input window, operand 6, single buffered']
    #allocation13 [shape = 'u8[32768]{0}', space=vmem, size = 0x8000, scoped, tag = 'input window, operand 8, single buffered']
    #allocation14 [shape = 's32[1]{0}', space=sflag, size = 0x4, scoped, tag = 'scoped memory for tpu_custom_call.1']
    #allocation15 [shape = 'u8[4096]{0}', space=vmem, size = 0x1000, scoped, tag = 'output window, operand 0, single buffered']
    %15 = vsyncpa [#allocation5], 0
    %16 = vsyncpa [#allocation8], 0
    %17 = vsyncpa [#allocation11], 0
    %18 = vsyncpa [#allocation14], 0
    %19 = vsyncpa [#allocation6], 0
    // Predicated region
    $region2: #{tpu_custom_call.1} parent=1 // pred_check
      _
    $region3: #{tpu_custom_call.1} parent=1 // pred_check_branch
      %21 = sbr.rel (0) target = $region5
    $region4: #{tpu_custom_call.1} parent=1 // pred_region
      %s23 = ssub.s32 16, 16
      %24 = vsyncadd [#allocation5], %s23
      %s26 = sshll.u32 [#allocation4], 4
      %s27 = int_to_ptr.vmem [resolvable:$true] %s26
      %29 = dma.hbm_to_vmem [thread:$0]  %s0, 16, %s27, [#allocation5]
    $region5: #{tpu_custom_call.1} parent=1 // pred_fallthru
      _
    // Predicated region
    $region6: #{tpu_custom_call.1} parent=1 // pred_check
      _
    $region7: #{tpu_custom_call.1} parent=1 // pred_check_branch
      %31 = sbr.rel (0) target = $region9
    $region8: #{tpu_custom_call.1} parent=1 // pred_region
      %s33 = ssub.s32 1024, 1024
      %34 = vsyncadd [#allocation8], %s33
      %s35 = sshll.u32 [#allocation7], 4
      %s36 = int_to_ptr.vmem [resolvable:$true] %s35
      %41 = dma.hbm_to_vmem [thread:$0]  %s1, 1024, %s36, [#allocation8], 64, 64, 4
    $region9: #{tpu_custom_call.1} parent=1 // pred_fallthru
      _
    // Predicated region
    $region10: #{tpu_custom_call.1} parent=1 // pred_check
      _
    $region11: #{tpu_custom_call.1} parent=1 // pred_check_branch
      %43 = sbr.rel (0) target = $region13
    $region12: #{tpu_custom_call.1} parent=1 // pred_region
      %s45 = ssub.s32 2048, 2048
      %46 = vsyncadd [#allocation8], %s45
      %s47 = sshll.u32 [#allocation9], 4
      %s48 = int_to_ptr.vmem [resolvable:$true] %s47
      %53 = dma.hbm_to_vmem [thread:$0]  %s2, 2048, %s48, [#allocation8], 128, 128, 8
    $region13: #{tpu_custom_call.1} parent=1 // pred_fallthru
      _
    // Predicated region
    $region14: #{tpu_custom_call.1} parent=1 // pred_check
      _
    $region15: #{tpu_custom_call.1} parent=1 // pred_check_branch
      %55 = sbr.rel (0) target = $region17
    $region16: #{tpu_custom_call.1} parent=1 // pred_region
      _
    $region17: #{tpu_custom_call.1} parent=1 // pred_fallthru
      _
    // Predicated region
    $region18: #{tpu_custom_call.1} parent=1 // pred_check
      _
    $region19: #{tpu_custom_call.1} parent=1 // pred_check_branch
      %57 = sbr.rel (0) target = $region21
    $region20: #{tpu_custom_call.1} parent=1 // pred_region
      %s59 = ssub.s32 4096, 4096
      %60 = vsyncadd [#allocation11], %s59
      %s61 = sshll.u32 [#allocation10], 4
      %s62 = int_to_ptr.vmem [resolvable:$true] %s61
      %67 = dma.hbm_to_vmem [thread:$0]  %s4, 4096, %s62, [#allocation11], 128, 128, 8
    $region21: #{tpu_custom_call.1} parent=1 // pred_fallthru
      _
    // Predicated region
    $region22: #{tpu_custom_call.1} parent=1 // pred_check
      _
    $region23: #{tpu_custom_call.1} parent=1 // pred_check_branch
      %69 = sbr.rel (0) target = $region25
    $region24: #{tpu_custom_call.1} parent=1 // pred_region
      _
    $region25: #{tpu_custom_call.1} parent=1 // pred_fallthru
      _
    // Predicated region
    $region26: #{tpu_custom_call.1} parent=1 // pred_check
      _
    $region27: #{tpu_custom_call.1} parent=1 // pred_check_branch
      %71 = sbr.rel (0) target = $region29
    $region28: #{tpu_custom_call.1} parent=1 // pred_region
      %s73 = ssub.s32 1024, 1024
      %74 = vsyncadd [#allocation11], %s73
      %s75 = sshll.u32 [#allocation12], 4
      %s76 = int_to_ptr.vmem [resolvable:$true] %s75
      %81 = dma.hbm_to_vmem [thread:$0]  %s6, 1024, %s76, [#allocation11], 64, 64, 4
    $region29: #{tpu_custom_call.1} parent=1 // pred_fallthru
      _
    // Predicated region
    $region30: #{tpu_custom_call.1} parent=1 // pred_check
      _
    $region31: #{tpu_custom_call.1} parent=1 // pred_check_branch
      %83 = sbr.rel (0) target = $region33
    $region32: #{tpu_custom_call.1} parent=1 // pred_region
      _
    $region33: #{tpu_custom_call.1} parent=1 // pred_fallthru
      _
    // Predicated region
    $region34: #{tpu_custom_call.1} parent=1 // pred_check
      _
    $region35: #{tpu_custom_call.1} parent=1 // pred_check_branch
      %85 = sbr.rel (0) target = $region37
    $region36: #{tpu_custom_call.1} parent=1 // pred_region
      %s87 = ssub.s32 1024, 1024
      %88 = vsyncadd [#allocation14], %s87
      %s89 = sshll.u32 [#allocation13], 4
      %s90 = int_to_ptr.vmem [resolvable:$true] %s89
      %95 = dma.hbm_to_vmem [thread:$0]  %s8, 1024, %s90, [#allocation14], 64, 64, 4
    $region37: #{tpu_custom_call.1} parent=1 // pred_fallthru
      _
    // Predicated region
    $region38: #{tpu_custom_call.1} parent=1 // pred_check
      _
    $region39: #{tpu_custom_call.1} parent=1 // pred_check_branch
      %97 = sbr.rel (0) target = $region41
    $region40: #{tpu_custom_call.1} parent=1 // pred_region
      _
    $region41: #{tpu_custom_call.1} parent=1 // pred_fallthru
      _
    // Predicated region
    $region42: #{tpu_custom_call.1} parent=1 // pred_check
      _
    $region43: #{tpu_custom_call.1} parent=1 // pred_check_branch
      %99 = sbr.rel (0) target = $region45
    $region44: #{tpu_custom_call.1} parent=1 // pred_region
      %100 = dma.done [#allocation5], 16
    $region45: #{tpu_custom_call.1} parent=1 // pred_fallthru
      _
    // Predicated region
    $region46: #{tpu_custom_call.1} parent=1 // pred_check
      _
    $region47: #{tpu_custom_call.1} parent=1 // pred_check_branch
      %102 = sbr.rel (0) target = $region49
    $region48: #{tpu_custom_call.1} parent=1 // pred_region
      %103 = dma.done [#allocation8], 1024
    $region49: #{tpu_custom_call.1} parent=1 // pred_fallthru
      _
    // Predicated region
    $region50: #{tpu_custom_call.1} parent=1 // pred_check
      _
    $region51: #{tpu_custom_call.1} parent=1 // pred_check_branch
      %105 = sbr.rel (0) target = $region53
    $region52: #{tpu_custom_call.1} parent=1 // pred_region
      %106 = dma.done [#allocation8], 2048
    $region53: #{tpu_custom_call.1} parent=1 // pred_fallthru
      _
    // Predicated region
    $region54: #{tpu_custom_call.1} parent=1 // pred_check
      _
    $region55: #{tpu_custom_call.1} parent=1 // pred_check_branch
      %108 = sbr.rel (0) target = $region57
    $region56: #{tpu_custom_call.1} parent=1 // pred_region
      %109 = dma.done [#allocation11], 4096
    $region57: #{tpu_custom_call.1} parent=1 // pred_fallthru
      _
    // Predicated region
    $region58: #{tpu_custom_call.1} parent=1 // pred_check
      _
    $region59: #{tpu_custom_call.1} parent=1 // pred_check_branch
      %111 = sbr.rel (0) target = $region61
    $region60: #{tpu_custom_call.1} parent=1 // pred_region
      %112 = dma.done [#allocation11], 1024
    $region61: #{tpu_custom_call.1} parent=1 // pred_fallthru
      _
    // Predicated region
    $region62: #{tpu_custom_call.1} parent=1 // pred_check
      _
    $region63: #{tpu_custom_call.1} parent=1 // pred_check_branch
      %114 = sbr.rel (0) target = $region65
    $region64: #{tpu_custom_call.1} parent=1 // pred_region
      %115 = dma.done [#allocation14], 1024
    $region65: #{tpu_custom_call.1} parent=1 // pred_fallthru
      _
    %p117 = scmp.eq.s32.totalorder 0, 0
    // Predicated region
    $region66: #{tpu_custom_call.1} parent=1 // pred_check
      %p118 = pneg %p117
    $region67: #{tpu_custom_call.1} parent=1 // pred_check_branch
      %120 = sbr.rel (%p118) target = $region69
    $region68: #{tpu_custom_call.1} parent=1 // pred_region
      %121 = vst [vmem:[#allocation2] sm:$0xff] 0.0
      %v122 = vlaneseq
      %v123 = vshrl.u32 %v122, 7
      %124 = vst [vmem:[#allocation3] sm:$0xff] %v123
    $region69: #{tpu_custom_call.1} parent=1 // pred_fallthru
      _
    %v125 = vld [vmem:[#allocation7] sm:$0xf]
    %v126 = vld [vmem:[#allocation7 + $0x4] sm:$0xf]
    %v127 = vld [vmem:[#allocation7 + $0x8] sm:$0xf]
    %v128 = vld [vmem:[#allocation7 + $0xc] sm:$0xf]
    %v129 = vld [vmem:[#allocation7 + $0x10] sm:$0xf]
    %v130 = vld [vmem:[#allocation7 + $0x14] sm:$0xf]
    %v131 = vld [vmem:[#allocation7 + $0x18] sm:$0xf]
    %v132 = vld [vmem:[#allocation7 + $0x1c] sm:$0xf]
    %v133 = vld [vmem:[#allocation7 + $0x20] sm:$0xf]
    %v134 = vld [vmem:[#allocation7 + $0x24] sm:$0xf]
    %v135 = vld [vmem:[#allocation7 + $0x28] sm:$0xf]
    %v136 = vld [vmem:[#allocation7 + $0x2c] sm:$0xf]
    %v137 = vld [vmem:[#allocation7 + $0x30] sm:$0xf]
    %v138 = vld [vmem:[#allocation7 + $0x34] sm:$0xf]
    %v139 = vld [vmem:[#allocation7 + $0x38] sm:$0xf]
    %v140 = vld [vmem:[#allocation7 + $0x3c] sm:$0xf]
    %v141 = vld [vmem:[#allocation9] sm:$0xff]
    %v142 = vld [vmem:[#allocation9 + $0x8] sm:$0xff]
    %v143 = vld [vmem:[#allocation9 + $0x10] sm:$0xff]
    %v144 = vld [vmem:[#allocation9 + $0x18] sm:$0xff]
    %v145 = vld [vmem:[#allocation9 + $0x20] sm:$0xff]
    %v146 = vld [vmem:[#allocation9 + $0x28] sm:$0xff]
    %v147 = vld [vmem:[#allocation9 + $0x30] sm:$0xff]
    %v148 = vld [vmem:[#allocation9 + $0x38] sm:$0xff]
    %v149 = vld [vmem:[#allocation9 + $0x40] sm:$0xff]
    %v150 = vld [vmem:[#allocation9 + $0x48] sm:$0xff]
    %v151 = vld [vmem:[#allocation9 + $0x50] sm:$0xff]
    %v152 = vld [vmem:[#allocation9 + $0x58] sm:$0xff]
    %v153 = vld [vmem:[#allocation9 + $0x60] sm:$0xff]
    %v154 = vld [vmem:[#allocation9 + $0x68] sm:$0xff]
    %v155 = vld [vmem:[#allocation9 + $0x70] sm:$0xff]
    %v156 = vld [vmem:[#allocation9 + $0x78] sm:$0xff]
    %v157 = vld [vmem:[%s3] sm:$0x3]
    %v159 = vlaneseq
    %v160 = vshrl.u32 %v159, 7
    %v161 = vsub.s32 0, %v160
    %v162 = vrot.slane %v157, %v161
    %v163 = vlaneseq
    %v164 = vshrl.u32 %v163, 7
    %v165 = vsub.s32 1, %v164
    %v166 = vrot.slane %v157, %v165
    %v185 = vunpack.c.l.b16 %v125
    %v186 = vunpack.c.l.b16 %v126
    %v187 = vunpack.c.l.b16 %v127
    %v188 = vunpack.c.l.b16 %v128
    %v189 = vunpack.c.l.b16 %v129
    %v190 = vunpack.c.l.b16 %v130
    %v191 = vunpack.c.l.b16 %v131
    %v192 = vunpack.c.l.b16 %v132
    %v193 = vunpack.c.l.b16 %v133
    %v194 = vunpack.c.l.b16 %v134
    %v195 = vunpack.c.l.b16 %v135
    %v196 = vunpack.c.l.b16 %v136
    %v197 = vunpack.c.l.b16 %v137
    %v198 = vunpack.c.l.b16 %v138
    %v199 = vunpack.c.l.b16 %v139
    %v200 = vunpack.c.l.b16 %v140
    %v201 = vpack.c.b16 %v186, %v185
    %v202 = vpack.c.b16 %v188, %v187
    %v203 = vpack.c.b16 %v190, %v189
    %v204 = vpack.c.b16 %v192, %v191
    %v205 = vpack.c.b16 %v194, %v193
    %v206 = vpack.c.b16 %v196, %v195
    %v207 = vpack.c.b16 %v198, %v197
    %v208 = vpack.c.b16 %v200, %v199
    %v233 = vunpack.c.l.b16 %v141
    %v234 = vunpack.c.h.b16 %v141
    %v235 = vunpack.c.l.b16 %v142
    %v236 = vunpack.c.h.b16 %v142
    %v237 = vunpack.c.l.b16 %v143
    %v238 = vunpack.c.h.b16 %v143
    %v239 = vunpack.c.l.b16 %v144
    %v240 = vunpack.c.h.b16 %v144
    %v241 = vunpack.c.l.b16 %v145
    %v242 = vunpack.c.h.b16 %v145
    %v243 = vunpack.c.l.b16 %v146
    %v244 = vunpack.c.h.b16 %v146
    %v245 = vunpack.c.l.b16 %v147
    %v246 = vunpack.c.h.b16 %v147
    %v247 = vunpack.c.l.b16 %v148
    %v248 = vunpack.c.h.b16 %v148
    %v249 = vunpack.c.l.b16 %v149
    %v250 = vunpack.c.h.b16 %v149
    %v251 = vunpack.c.l.b16 %v150
    %v252 = vunpack.c.h.b16 %v150
    %v253 = vunpack.c.l.b16 %v151
    %v254 = vunpack.c.h.b16 %v151
    %v255 = vunpack.c.l.b16 %v152
    %v256 = vunpack.c.h.b16 %v152
    %v257 = vunpack.c.l.b16 %v153
    %v258 = vunpack.c.h.b16 %v153
    %v259 = vunpack.c.l.b16 %v154
    %v260 = vunpack.c.h.b16 %v154
    %v261 = vunpack.c.l.b16 %v155
    %v262 = vunpack.c.h.b16 %v155
    %v263 = vunpack.c.l.b16 %v156
    %v264 = vunpack.c.h.b16 %v156
    %v265 = vpack.c.b16 %v235, %v233
    %v266 = vpack.c.b16 %v236, %v234
    %v267 = vpack.c.b16 %v239, %v237
    %v268 = vpack.c.b16 %v240, %v238
    %v269 = vpack.c.b16 %v243, %v241
    %v270 = vpack.c.b16 %v244, %v242
    %v271 = vpack.c.b16 %v247, %v245
    %v272 = vpack.c.b16 %v248, %v246
    %v273 = vpack.c.b16 %v251, %v249
    %v274 = vpack.c.b16 %v252, %v250
    %v275 = vpack.c.b16 %v255, %v253
    %v276 = vpack.c.b16 %v256, %v254
    %v277 = vpack.c.b16 %v259, %v257
    %v278 = vpack.c.b16 %v260, %v258
    %v279 = vpack.c.b16 %v263, %v261
    %v280 = vpack.c.b16 %v264, %v262
    %297 = vmatprep.subr.bf16.mxu0 %v266
    %298 = vmatpush1.bf16.msra.mxu0 %v265
    %299 = vmatprep.subr.bf16.mxu0 %v268
    %300 = vmatpush1.bf16.msra.mxu0 %v267
    %301 = vmatprep.subr.bf16.mxu0 %v270
    %302 = vmatpush1.bf16.msra.mxu0 %v269
    %303 = vmatprep.subr.bf16.mxu0 %v272
    %304 = vmatpush1.bf16.msra.mxu0 %v271
    %305 = vmatprep.subr.bf16.mxu0 %v274
    %306 = vmatpush1.bf16.msra.mxu0 %v273
    %307 = vmatprep.subr.bf16.mxu0 %v276
    %308 = vmatpush1.bf16.msra.mxu0 %v275
    %309 = vmatprep.subr.bf16.mxu0 %v278
    %310 = vmatpush1.bf16.msra.mxu0 %v277
    %311 = vmatprep.subr.bf16.mxu0 %v280
    %312 = vmatpush1.bf16.msra.mxu0 %v279
    %313 = vmatprep.subr.bf16.mxu0 0
    %314 = vmatpush1.bf16.msra.mxu0 0
    %315 = vmatprep.subr.bf16.mxu0 0
    %316 = vmatpush1.bf16.msra.mxu0 0
    %317 = vmatprep.subr.bf16.mxu0 0
    %318 = vmatpush1.bf16.msra.mxu0 0
    %319 = vmatprep.subr.bf16.mxu0 0
    %320 = vmatpush1.bf16.msra.mxu0 0
    %321 = vmatprep.subr.bf16.mxu0 0
    %322 = vmatpush1.bf16.msra.mxu0 0
    %323 = vmatprep.subr.bf16.mxu0 0
    %324 = vmatpush1.bf16.msra.mxu0 0
    %325 = vmatprep.subr.bf16.mxu0 0
    %326 = vmatpush1.bf16.msra.mxu0 0
    %327 = vmatprep.subr.bf16.mxu0 0
    %328 = vmatpush1.bf16.msra.mxu0 0
    %329 = vmatprep.mubr.bf16.mxu0 0
    %330 = vmatmul.mubr.bf16.gmra.mrb[0].mxu0 %v201
    %v331 = vpop.f32.mrb[0].mxu0
    %v332 = vadd.f32 %v162, %v331
    %v333 = vpop.f32.mrb[0].mxu0
    %v334 = vadd.f32 %v166, %v333
    %v335 = vpop.f32.mrb[0].mxu0
    %v336 = vadd.f32 %v162, %v335
    %v337 = vpop.f32.mrb[0].mxu0
    %v338 = vadd.f32 %v166, %v337
    %339 = vmatprep.mubr.bf16.mxu0 0
    %340 = vmatmul.mubr.bf16.gmra.mrb[0].mxu0 %v202
    %v341 = vpop.f32.mrb[0].mxu0
    %v342 = vadd.f32 %v162, %v341
    %v343 = vpop.f32.mrb[0].mxu0
    %v344 = vadd.f32 %v166, %v343
    %v345 = vpop.f32.mrb[0].mxu0
    %v346 = vadd.f32 %v162, %v345
    %v347 = vpop.f32.mrb[0].mxu0
    %v348 = vadd.f32 %v166, %v347
    %349 = vmatprep.mubr.bf16.mxu0 0
    %350 = vmatmul.mubr.bf16.gmra.mrb[0].mxu0 %v203
    %v351 = vpop.f32.mrb[0].mxu0
    %v352 = vadd.f32 %v162, %v351
    %v353 = vpop.f32.mrb[0].mxu0
    %v354 = vadd.f32 %v166, %v353
    %v355 = vpop.f32.mrb[0].mxu0
    %v356 = vadd.f32 %v162, %v355
    %v357 = vpop.f32.mrb[0].mxu0
    %v358 = vadd.f32 %v166, %v357
    %359 = vmatprep.mubr.bf16.mxu0 0
    %360 = vmatmul.mubr.bf16.gmra.mrb[0].mxu0 %v204
    %v361 = vpop.f32.mrb[0].mxu0
    %v362 = vadd.f32 %v162, %v361
    %v363 = vpop.f32.mrb[0].mxu0
    %v364 = vadd.f32 %v166, %v363
    %v365 = vpop.f32.mrb[0].mxu0
    %v366 = vadd.f32 %v162, %v365
    %v367 = vpop.f32.mrb[0].mxu0
    %v368 = vadd.f32 %v166, %v367
    %369 = vmatprep.mubr.bf16.mxu0 0
    %370 = vmatmul.mubr.bf16.gmra.mrb[0].mxu0 %v205
    %v371 = vpop.f32.mrb[0].mxu0
    %v372 = vadd.f32 %v162, %v371
    %v373 = vpop.f32.mrb[0].mxu0
    %v374 = vadd.f32 %v166, %v373
    %v375 = vpop.f32.mrb[0].mxu0
    %v376 = vadd.f32 %v162, %v375
    %v377 = vpop.f32.mrb[0].mxu0
    %v378 = vadd.f32 %v166, %v377
    %379 = vmatprep.mubr.bf16.mxu0 0
    %380 = vmatmul.mubr.bf16.gmra.mrb[0].mxu0 %v206
    %v381 = vpop.f32.mrb[0].mxu0
    %v382 = vadd.f32 %v162, %v381
    %v383 = vpop.f32.mrb[0].mxu0
    %v384 = vadd.f32 %v166, %v383
    %v385 = vpop.f32.mrb[0].mxu0
    %v386 = vadd.f32 %v162, %v385
    %v387 = vpop.f32.mrb[0].mxu0
    %v388 = vadd.f32 %v166, %v387
    %389 = vmatprep.mubr.bf16.mxu0 0
    %390 = vmatmul.mubr.bf16.gmra.mrb[0].mxu0 %v207
    %v391 = vpop.f32.mrb[0].mxu0
    %v392 = vadd.f32 %v162, %v391
    %v393 = vpop.f32.mrb[0].mxu0
    %v394 = vadd.f32 %v166, %v393
    %v395 = vpop.f32.mrb[0].mxu0
    %v396 = vadd.f32 %v162, %v395
    %v397 = vpop.f32.mrb[0].mxu0
    %v398 = vadd.f32 %v166, %v397
    %399 = vmatprep.mubr.bf16.mxu0 0
    %400 = vmatmul.mubr.bf16.gmra.mrb[0].mxu0 %v208
    %v401 = vpop.f32.mrb[0].mxu0
    %v402 = vadd.f32 %v162, %v401
    %v403 = vpop.f32.mrb[0].mxu0
    %v404 = vadd.f32 %v166, %v403
    %v405 = vpop.f32.mrb[0].mxu0
    %v406 = vadd.f32 %v162, %v405
    %v407 = vpop.f32.mrb[0].mxu0
    %v408 = vadd.f32 %v166, %v407
    %409 = vdwg.mxu0
    %v410 = vmax.f32 %v332, 0.0
    %v411 = vmax.f32 %v334, 0.0
    %v412 = vmax.f32 %v336, 0.0
    %v413 = vmax.f32 %v338, 0.0
    %v414 = vmax.f32 %v342, 0.0
    %v415 = vmax.f32 %v344, 0.0
    %v416 = vmax.f32 %v346, 0.0
    %v417 = vmax.f32 %v348, 0.0
    %v418 = vmax.f32 %v352, 0.0
    %v419 = vmax.f32 %v354, 0.0
    %v420 = vmax.f32 %v356, 0.0
    %v421 = vmax.f32 %v358, 0.0
    %v422 = vmax.f32 %v362, 0.0
    %v423 = vmax.f32 %v364, 0.0
    %v424 = vmax.f32 %v366, 0.0
    %v425 = vmax.f32 %v368, 0.0
    %v426 = vmax.f32 %v372, 0.0
    %v427 = vmax.f32 %v374, 0.0
    %v428 = vmax.f32 %v376, 0.0
    %v429 = vmax.f32 %v378, 0.0
    %v430 = vmax.f32 %v382, 0.0
    %v431 = vmax.f32 %v384, 0.0
    %v432 = vmax.f32 %v386, 0.0
    %v433 = vmax.f32 %v388, 0.0
    %v434 = vmax.f32 %v392, 0.0
    %v435 = vmax.f32 %v394, 0.0
    %v436 = vmax.f32 %v396, 0.0
    %v437 = vmax.f32 %v398, 0.0
    %v438 = vmax.f32 %v402, 0.0
    %v439 = vmax.f32 %v404, 0.0
    %v440 = vmax.f32 %v406, 0.0
    %v441 = vmax.f32 %v408, 0.0
    %v442 = vpack.c.bf16 %v412, %v410
    %v443 = vpack.c.bf16 %v413, %v411
    %v444 = vpack.c.bf16 %v416, %v414
    %v445 = vpack.c.bf16 %v417, %v415
    %v446 = vpack.c.bf16 %v420, %v418
    %v447 = vpack.c.bf16 %v421, %v419
    %v448 = vpack.c.bf16 %v424, %v422
    %v449 = vpack.c.bf16 %v425, %v423
    %v450 = vpack.c.bf16 %v428, %v426
    %v451 = vpack.c.bf16 %v429, %v427
    %v452 = vpack.c.bf16 %v432, %v430
    %v453 = vpack.c.bf16 %v433, %v431
    %v454 = vpack.c.bf16 %v436, %v434
    %v455 = vpack.c.bf16 %v437, %v435
    %v456 = vpack.c.bf16 %v440, %v438
    %v457 = vpack.c.bf16 %v441, %v439
    %v458 = vld [vmem:[#allocation10] sm:$0xff]
    %v459 = vld [vmem:[#allocation10 + $0x8] sm:$0xff]
    %v460 = vld [vmem:[#allocation10 + $0x10] sm:$0xff]
    %v461 = vld [vmem:[#allocation10 + $0x18] sm:$0xff]
    %v462 = vld [vmem:[#allocation10 + $0x20] sm:$0xff]
    %v463 = vld [vmem:[#allocation10 + $0x28] sm:$0xff]
    %v464 = vld [vmem:[#allocation10 + $0x30] sm:$0xff]
    %v465 = vld [vmem:[#allocation10 + $0x38] sm:$0xff]
    %v466 = vld [vmem:[#allocation10 + $0x40] sm:$0xff]
    %v467 = vld [vmem:[#allocation10 + $0x48] sm:$0xff]
    %v468 = vld [vmem:[#allocation10 + $0x50] sm:$0xff]
    %v469 = vld [vmem:[#allocation10 + $0x58] sm:$0xff]
    %v470 = vld [vmem:[#allocation10 + $0x60] sm:$0xff]
    %v471 = vld [vmem:[#allocation10 + $0x68] sm:$0xff]
    %v472 = vld [vmem:[#allocation10 + $0x70] sm:$0xff]
    %v473 = vld [vmem:[#allocation10 + $0x78] sm:$0xff]
    %v474 = vld [vmem:[#allocation10 + $0x80] sm:$0xff]
    %v475 = vld [vmem:[#allocation10 + $0x88] sm:$0xff]
    %v476 = vld [vmem:[#allocation10 + $0x90] sm:$0xff]
    %v477 = vld [vmem:[#allocation10 + $0x98] sm:$0xff]
    %v478 = vld [vmem:[#allocation10 + $0xa0] sm:$0xff]
    %v479 = vld [vmem:[#allocation10 + $0xa8] sm:$0xff]
    %v480 = vld [vmem:[#allocation10 + $0xb0] sm:$0xff]
    %v481 = vld [vmem:[#allocation10 + $0xb8] sm:$0xff]
    %v482 = vld [vmem:[#allocation10 + $0xc0] sm:$0xff]
    %v483 = vld [vmem:[#allocation10 + $0xc8] sm:$0xff]
    %v484 = vld [vmem:[#allocation10 + $0xd0] sm:$0xff]
    %v485 = vld [vmem:[#allocation10 + $0xd8] sm:$0xff]
    %v486 = vld [vmem:[#allocation10 + $0xe0] sm:$0xff]
    %v487 = vld [vmem:[#allocation10 + $0xe8] sm:$0xff]
    %v488 = vld [vmem:[#allocation10 + $0xf0] sm:$0xff]
    %v489 = vld [vmem:[#allocation10 + $0xf8] sm:$0xff]
    %v490 = vld [vmem:[%s5] sm:$0x3]
    %v492 = vlaneseq
    %v493 = vshrl.u32 %v492, 7
    %v494 = vsub.s32 0, %v493
    %v495 = vrot.slane %v490, %v494
    %v496 = vlaneseq
    %v497 = vshrl.u32 %v496, 7
    %v498 = vsub.s32 1, %v497
    %v499 = vrot.slane %v490, %v498
    %v534 = vunpack.c.l.b16 %v458
    %v535 = vunpack.c.h.b16 %v458
    %v536 = vunpack.c.l.b16 %v459
    %v537 = vunpack.c.h.b16 %v459
    %v538 = vunpack.c.l.b16 %v460
    %v539 = vunpack.c.h.b16 %v460
    %v540 = vunpack.c.l.b16 %v461
    %v541 = vunpack.c.h.b16 %v461
    %v542 = vunpack.c.l.b16 %v462
    %v543 = vunpack.c.h.b16 %v462
    %v544 = vunpack.c.l.b16 %v463
    %v545 = vunpack.c.h.b16 %v463
    %v546 = vunpack.c.l.b16 %v464
    %v547 = vunpack.c.h.b16 %v464
    %v548 = vunpack.c.l.b16 %v465
    %v549 = vunpack.c.h.b16 %v465
    %v550 = vunpack.c.l.b16 %v466
    %v551 = vunpack.c.h.b16 %v466
    %v552 = vunpack.c.l.b16 %v467
    %v553 = vunpack.c.h.b16 %v467
    %v554 = vunpack.c.l.b16 %v468
    %v555 = vunpack.c.h.b16 %v468
    %v556 = vunpack.c.l.b16 %v469
    %v557 = vunpack.c.h.b16 %v469
    %v558 = vunpack.c.l.b16 %v470
    %v559 = vunpack.c.h.b16 %v470
    %v560 = vunpack.c.l.b16 %v471
    %v561 = vunpack.c.h.b16 %v471
    %v562 = vunpack.c.l.b16 %v472
    %v563 = vunpack.c.h.b16 %v472
    %v564 = vunpack.c.l.b16 %v473
    %v565 = vunpack.c.h.b16 %v473
    %v566 = vunpack.c.l.b16 %v474
    %v567 = vunpack.c.h.b16 %v474
    %v568 = vunpack.c.l.b16 %v475
    %v569 = vunpack.c.h.b16 %v475
    %v570 = vunpack.c.l.b16 %v476
    %v571 = vunpack.c.h.b16 %v476
    %v572 = vunpack.c.l.b16 %v477
    %v573 = vunpack.c.h.b16 %v477
    %v574 = vunpack.c.l.b16 %v478
    %v575 = vunpack.c.h.b16 %v478
    %v576 = vunpack.c.l.b16 %v479
    %v577 = vunpack.c.h.b16 %v479
    %v578 = vunpack.c.l.b16 %v480
    %v579 = vunpack.c.h.b16 %v480
    %v580 = vunpack.c.l.b16 %v481
    %v581 = vunpack.c.h.b16 %v481
    %v582 = vunpack.c.l.b16 %v482
    %v583 = vunpack.c.h.b16 %v482
    %v584 = vunpack.c.l.b16 %v483
    %v585 = vunpack.c.h.b16 %v483
    %v586 = vunpack.c.l.b16 %v484
    %v587 = vunpack.c.h.b16 %v484
    %v588 = vunpack.c.l.b16 %v485
    %v589 = vunpack.c.h.b16 %v485
    %v590 = vunpack.c.l.b16 %v486
    %v591 = vunpack.c.h.b16 %v486
    %v592 = vunpack.c.l.b16 %v487
    %v593 = vunpack.c.h.b16 %v487
    %v594 = vunpack.c.l.b16 %v488
    %v595 = vunpack.c.h.b16 %v488
    %v596 = vunpack.c.l.b16 %v489
    %v597 = vunpack.c.h.b16 %v489
    %v598 = vpack.c.b16 %v536, %v534
    %v599 = vpack.c.b16 %v537, %v535
    %v600 = vpack.c.b16 %v540, %v538
    %v601 = vpack.c.b16 %v541, %v539
    %v602 = vpack.c.b16 %v544, %v542
    %v603 = vpack.c.b16 %v545, %v543
    %v604 = vpack.c.b16 %v548, %v546
    %v605 = vpack.c.b16 %v549, %v547
    %v606 = vpack.c.b16 %v552, %v550
    %v607 = vpack.c.b16 %v553, %v551
    %v608 = vpack.c.b16 %v556, %v554
    %v609 = vpack.c.b16 %v557, %v555
    %v610 = vpack.c.b16 %v560, %v558
    %v611 = vpack.c.b16 %v561, %v559
    %v612 = vpack.c.b16 %v564, %v562
    %v613 = vpack.c.b16 %v565, %v563
    %v614 = vpack.c.b16 %v568, %v566
    %v615 = vpack.c.b16 %v569, %v567
    %v616 = vpack.c.b16 %v572, %v570
    %v617 = vpack.c.b16 %v573, %v571
    %v618 = vpack.c.b16 %v576, %v574
    %v619 = vpack.c.b16 %v577, %v575
    %v620 = vpack.c.b16 %v580, %v578
    %v621 = vpack.c.b16 %v581, %v579
    %v622 = vpack.c.b16 %v584, %v582
    %v623 = vpack.c.b16 %v585, %v583
    %v624 = vpack.c.b16 %v588, %v586
    %v625 = vpack.c.b16 %v589, %v587
    %v626 = vpack.c.b16 %v592, %v590
    %v627 = vpack.c.b16 %v593, %v591
    %v628 = vpack.c.b16 %v596, %v594
    %v629 = vpack.c.b16 %v597, %v595
    %662 = vmatprep.subr.bf16.mxu0 %v599
    %663 = vmatpush1.bf16.msra.mxu0 %v598
    %664 = vmatprep.subr.bf16.mxu0 %v601
    %665 = vmatpush1.bf16.msra.mxu0 %v600
    %666 = vmatprep.subr.bf16.mxu0 %v603
    %667 = vmatpush1.bf16.msra.mxu0 %v602
    %668 = vmatprep.subr.bf16.mxu0 %v605
    %669 = vmatpush1.bf16.msra.mxu0 %v604
    %670 = vmatprep.subr.bf16.mxu0 %v607
    %671 = vmatpush1.bf16.msra.mxu0 %v606
    %672 = vmatprep.subr.bf16.mxu0 %v609
    %673 = vmatpush1.bf16.msra.mxu0 %v608
    %674 = vmatprep.subr.bf16.mxu0 %v611
    %675 = vmatpush1.bf16.msra.mxu0 %v610
    %676 = vmatprep.subr.bf16.mxu0 %v613
    %677 = vmatpush1.bf16.msra.mxu0 %v612
    %678 = vmatprep.subr.bf16.mxu0 %v615
    %679 = vmatpush1.bf16.msra.mxu0 %v614
    %680 = vmatprep.subr.bf16.mxu0 %v617
    %681 = vmatpush1.bf16.msra.mxu0 %v616
    %682 = vmatprep.subr.bf16.mxu0 %v619
    %683 = vmatpush1.bf16.msra.mxu0 %v618
    %684 = vmatprep.subr.bf16.mxu0 %v621
    %685 = vmatpush1.bf16.msra.mxu0 %v620
    %686 = vmatprep.subr.bf16.mxu0 %v623
    %687 = vmatpush1.bf16.msra.mxu0 %v622
    %688 = vmatprep.subr.bf16.mxu0 %v625
    %689 = vmatpush1.bf16.msra.mxu0 %v624
    %690 = vmatprep.subr.bf16.mxu0 %v627
    %691 = vmatpush1.bf16.msra.mxu0 %v626
    %692 = vmatprep.subr.bf16.mxu0 %v629
    %693 = vmatpush1.bf16.msra.mxu0 %v628
    %694 = vmatprep.mubr.bf16.mxu0 %v443
    %695 = vmatmul.mubr.bf16.gmra.mrb[0].mxu0 %v442
    %v696 = vpop.f32.mrb[0].mxu0
    %v697 = vadd.f32 %v495, %v696
    %v698 = vpop.f32.mrb[0].mxu0
    %v699 = vadd.f32 %v499, %v698
    %v700 = vpop.f32.mrb[0].mxu0
    %v701 = vadd.f32 %v495, %v700
    %v702 = vpop.f32.mrb[0].mxu0
    %v703 = vadd.f32 %v499, %v702
    %704 = vmatprep.mubr.bf16.mxu0 %v445
    %705 = vmatmul.mubr.bf16.gmra.mrb[0].mxu0 %v444
    %v706 = vpop.f32.mrb[0].mxu0
    %v707 = vadd.f32 %v495, %v706
    %v708 = vpop.f32.mrb[0].mxu0
    %v709 = vadd.f32 %v499, %v708
    %v710 = vpop.f32.mrb[0].mxu0
    %v711 = vadd.f32 %v495, %v710
    %v712 = vpop.f32.mrb[0].mxu0
    %v713 = vadd.f32 %v499, %v712
    %714 = vmatprep.mubr.bf16.mxu0 %v447
    %715 = vmatmul.mubr.bf16.gmra.mrb[0].mxu0 %v446
    %v716 = vpop.f32.mrb[0].mxu0
    %v717 = vadd.f32 %v495, %v716
    %v718 = vpop.f32.mrb[0].mxu0
    %v719 = vadd.f32 %v499, %v718
    %v720 = vpop.f32.mrb[0].mxu0
    %v721 = vadd.f32 %v495, %v720
    %v722 = vpop.f32.mrb[0].mxu0
    %v723 = vadd.f32 %v499, %v722
    %724 = vmatprep.mubr.bf16.mxu0 %v449
    %725 = vmatmul.mubr.bf16.gmra.mrb[0].mxu0 %v448
    %v726 = vpop.f32.mrb[0].mxu0
    %v727 = vadd.f32 %v495, %v726
    %v728 = vpop.f32.mrb[0].mxu0
    %v729 = vadd.f32 %v499, %v728
    %v730 = vpop.f32.mrb[0].mxu0
    %v731 = vadd.f32 %v495, %v730
    %v732 = vpop.f32.mrb[0].mxu0
    %v733 = vadd.f32 %v499, %v732
    %734 = vmatprep.mubr.bf16.mxu0 %v451
    %735 = vmatmul.mubr.bf16.gmra.mrb[0].mxu0 %v450
    %v736 = vpop.f32.mrb[0].mxu0
    %v737 = vadd.f32 %v495, %v736
    %v738 = vpop.f32.mrb[0].mxu0
    %v739 = vadd.f32 %v499, %v738
    %v740 = vpop.f32.mrb[0].mxu0
    %v741 = vadd.f32 %v495, %v740
    %v742 = vpop.f32.mrb[0].mxu0
    %v743 = vadd.f32 %v499, %v742
    %744 = vmatprep.mubr.bf16.mxu0 %v453
    %745 = vmatmul.mubr.bf16.gmra.mrb[0].mxu0 %v452
    %v746 = vpop.f32.mrb[0].mxu0
    %v747 = vadd.f32 %v495, %v746
    %v748 = vpop.f32.mrb[0].mxu0
    %v749 = vadd.f32 %v499, %v748
    %v750 = vpop.f32.mrb[0].mxu0
    %v751 = vadd.f32 %v495, %v750
    %v752 = vpop.f32.mrb[0].mxu0
    %v753 = vadd.f32 %v499, %v752
    %754 = vmatprep.mubr.bf16.mxu0 %v455
    %755 = vmatmul.mubr.bf16.gmra.mrb[0].mxu0 %v454
    %v756 = vpop.f32.mrb[0].mxu0
    %v757 = vadd.f32 %v495, %v756
    %v758 = vpop.f32.mrb[0].mxu0
    %v759 = vadd.f32 %v499, %v758
    %v760 = vpop.f32.mrb[0].mxu0
    %v761 = vadd.f32 %v495, %v760
    %v762 = vpop.f32.mrb[0].mxu0
    %v763 = vadd.f32 %v499, %v762
    %764 = vmatprep.mubr.bf16.mxu0 %v457
    %765 = vmatmul.mubr.bf16.gmra.mrb[0].mxu0 %v456
    %v766 = vpop.f32.mrb[0].mxu0
    %v767 = vadd.f32 %v495, %v766
    %v768 = vpop.f32.mrb[0].mxu0
    %v769 = vadd.f32 %v499, %v768
    %v770 = vpop.f32.mrb[0].mxu0
    %v771 = vadd.f32 %v495, %v770
    %v772 = vpop.f32.mrb[0].mxu0
    %v773 = vadd.f32 %v499, %v772
    %774 = vdwg.mxu0
    %v775 = vmax.f32 %v697, 0.0
    %v776 = vmax.f32 %v699, 0.0
    %v777 = vmax.f32 %v701, 0.0
    %v778 = vmax.f32 %v703, 0.0
    %v779 = vmax.f32 %v707, 0.0
    %v780 = vmax.f32 %v709, 0.0
    %v781 = vmax.f32 %v711, 0.0
    %v782 = vmax.f32 %v713, 0.0
    %v783 = vmax.f32 %v717, 0.0
    %v784 = vmax.f32 %v719, 0.0
    %v785 = vmax.f32 %v721, 0.0
    %v786 = vmax.f32 %v723, 0.0
    %v787 = vmax.f32 %v727, 0.0
    %v788 = vmax.f32 %v729, 0.0
    %v789 = vmax.f32 %v731, 0.0
    %v790 = vmax.f32 %v733, 0.0
    %v791 = vmax.f32 %v737, 0.0
    %v792 = vmax.f32 %v739, 0.0
    %v793 = vmax.f32 %v741, 0.0
    %v794 = vmax.f32 %v743, 0.0
    %v795 = vmax.f32 %v747, 0.0
    %v796 = vmax.f32 %v749, 0.0
    %v797 = vmax.f32 %v751, 0.0
    %v798 = vmax.f32 %v753, 0.0
    %v799 = vmax.f32 %v757, 0.0
    %v800 = vmax.f32 %v759, 0.0
    %v801 = vmax.f32 %v761, 0.0
    %v802 = vmax.f32 %v763, 0.0
    %v803 = vmax.f32 %v767, 0.0
    %v804 = vmax.f32 %v769, 0.0
    %v805 = vmax.f32 %v771, 0.0
    %v806 = vmax.f32 %v773, 0.0
    %v807 = vsub.f32 0.0, %v776
    %v808 = vsub.f32 0.0, %v778
    %v809 = vsub.f32 0.0, %v780
    %v810 = vsub.f32 0.0, %v782
    %v811 = vsub.f32 0.0, %v784
    %v812 = vsub.f32 0.0, %v786
    %v813 = vsub.f32 0.0, %v788
    %v814 = vsub.f32 0.0, %v790
    %v815 = vsub.f32 0.0, %v792
    %v816 = vsub.f32 0.0, %v794
    %v817 = vsub.f32 0.0, %v796
    %v818 = vsub.f32 0.0, %v798
    %v819 = vsub.f32 0.0, %v800
    %v820 = vsub.f32 0.0, %v802
    %v821 = vsub.f32 0.0, %v804
    %v822 = vsub.f32 0.0, %v806
    %v823 = vmul.f32 %v807, 1.442695
    %v824 = vpow.pop %v823
    %v825 = vmul.f32 %v808, 1.442695
    %v826 = vpow.pop %v825
    %v827 = vmul.f32 %v809, 1.442695
    %v828 = vpow.pop %v827
    %v829 = vmul.f32 %v810, 1.442695
    %v830 = vpow.pop %v829
    %v831 = vmul.f32 %v811, 1.442695
    %v832 = vpow.pop %v831
    %v833 = vmul.f32 %v812, 1.442695
    %v834 = vpow.pop %v833
    %v835 = vmul.f32 %v813, 1.442695
    %v836 = vpow.pop %v835
    %v837 = vmul.f32 %v814, 1.442695
    %v838 = vpow.pop %v837
    %v839 = vmul.f32 %v815, 1.442695
    %v840 = vpow.pop %v839
    %v841 = vmul.f32 %v816, 1.442695
    %v842 = vpow.pop %v841
    %v843 = vmul.f32 %v817, 1.442695
    %v844 = vpow.pop %v843
    %v845 = vmul.f32 %v818, 1.442695
    %v846 = vpow.pop %v845
    %v847 = vmul.f32 %v819, 1.442695
    %v848 = vpow.pop %v847
    %v849 = vmul.f32 %v820, 1.442695
    %v850 = vpow.pop %v849
    %v851 = vmul.f32 %v821, 1.442695
    %v852 = vpow.pop %v851
    %v853 = vmul.f32 %v822, 1.442695
    %v854 = vpow.pop %v853
    %v855 = vadd.f32 %v824, 1.0
    %v856 = vadd.f32 %v826, 1.0
    %v857 = vadd.f32 %v828, 1.0
    %v858 = vadd.f32 %v830, 1.0
    %v859 = vadd.f32 %v832, 1.0
    %v860 = vadd.f32 %v834, 1.0
    %v861 = vadd.f32 %v836, 1.0
    %v862 = vadd.f32 %v838, 1.0
    %v863 = vadd.f32 %v840, 1.0
    %v864 = vadd.f32 %v842, 1.0
    %v865 = vadd.f32 %v844, 1.0
    %v866 = vadd.f32 %v846, 1.0
    %v867 = vadd.f32 %v848, 1.0
    %v868 = vadd.f32 %v850, 1.0
    %v869 = vadd.f32 %v852, 1.0
    %v870 = vadd.f32 %v854, 1.0
    %v871 = vrcp.pop %v855
    %v872 = vrcp.pop %v856
    %v873 = vrcp.pop %v857
    %v874 = vrcp.pop %v858
    %v875 = vrcp.pop %v859
    %v876 = vrcp.pop %v860
    %v877 = vrcp.pop %v861
    %v878 = vrcp.pop %v862
    %v879 = vrcp.pop %v863
    %v880 = vrcp.pop %v864
    %v881 = vrcp.pop %v865
    %v882 = vrcp.pop %v866
    %v883 = vrcp.pop %v867
    %v884 = vrcp.pop %v868
    %v885 = vrcp.pop %v869
    %v886 = vrcp.pop %v870
    %v887 = vmul.f32 %v871, %v775
    %v888 = vmul.f32 %v872, %v777
    %v889 = vmul.f32 %v873, %v779
    %v890 = vmul.f32 %v874, %v781
    %v891 = vmul.f32 %v875, %v783
    %v892 = vmul.f32 %v876, %v785
    %v893 = vmul.f32 %v877, %v787
    %v894 = vmul.f32 %v878, %v789
    %v895 = vmul.f32 %v879, %v791
    %v896 = vmul.f32 %v880, %v793
    %v897 = vmul.f32 %v881, %v795
    %v898 = vmul.f32 %v882, %v797
    %v899 = vmul.f32 %v883, %v799
    %v900 = vmul.f32 %v884, %v801
    %v901 = vmul.f32 %v885, %v803
    %v902 = vmul.f32 %v886, %v805
    %v903 = vld [vmem:[#allocation3] sm:$0xff]
    %v904 = vld [vmem:[#allocation4] sm:$0x1]
    %v905 = vlaneseq
    %v906 = vshrl.u32 %v905, 7
    %v907 = vsub.s32 0, %v906
    %v908 = vrot.slane %v904, %v907
    %vm909 = vcmp.eq.s32.totalorder %v903, %v908
    %v910 = vsel %vm909, 1, 0
    %v911 = vcvt.s32.f32 %v910
    %v912 = vpack.c.bf16 %v911, %v911
    %v913 = vld [vmem:[#allocation2] sm:$0xff]
    %v914 = vpack.c.bf16 %v888, %v887
    %v915 = vpack.c.bf16 %v890, %v889
    %v916 = vpack.c.bf16 %v892, %v891
    %v917 = vpack.c.bf16 %v894, %v893
    %v918 = vpack.c.bf16 %v896, %v895
    %v919 = vpack.c.bf16 %v898, %v897
    %v920 = vpack.c.bf16 %v900, %v899
    %v921 = vpack.c.bf16 %v902, %v901
    %922 = vmatprep.subr.bf16.mxu0 0
    %923 = vmatpush1.bf16.msra.mxu0 %v914
    %924 = vmatprep.subr.bf16.mxu0 0
    %925 = vmatpush1.bf16.msra.mxu0 %v915
    %926 = vmatprep.subr.bf16.mxu0 0
    %927 = vmatpush1.bf16.msra.mxu0 %v916
    %928 = vmatprep.subr.bf16.mxu0 0
    %929 = vmatpush1.bf16.msra.mxu0 %v917
    %930 = vmatprep.subr.bf16.mxu0 0
    %931 = vmatpush1.bf16.msra.mxu0 %v918
    %932 = vmatprep.subr.bf16.mxu0 0
    %933 = vmatpush1.bf16.msra.mxu0 %v919
    %934 = vmatprep.subr.bf16.mxu0 0
    %935 = vmatpush1.bf16.msra.mxu0 %v920
    %936 = vmatprep.subr.bf16.mxu0 0
    %937 = vmatpush1.bf16.msra.mxu0 %v921
    %938 = vmatprep.subr.bf16.mxu0 0
    %939 = vmatpush1.bf16.msra.mxu0 0
    %940 = vmatprep.subr.bf16.mxu0 0
    %941 = vmatpush1.bf16.msra.mxu0 0
    %942 = vmatprep.subr.bf16.mxu0 0
    %943 = vmatpush1.bf16.msra.mxu0 0
    %944 = vmatprep.subr.bf16.mxu0 0
    %945 = vmatpush1.bf16.msra.mxu0 0
    %946 = vmatprep.subr.bf16.mxu0 0
    %947 = vmatpush1.bf16.msra.mxu0 0
    %948 = vmatprep.subr.bf16.mxu0 0
    %949 = vmatpush1.bf16.msra.mxu0 0
    %950 = vmatprep.subr.bf16.mxu0 0
    %951 = vmatpush1.bf16.msra.mxu0 0
    %952 = vmatprep.subr.bf16.mxu0 0
    %953 = vmatpush1.bf16.msra.mxu0 0
    %954 = vmatprep.mubr.bf16.mxu0 0
    %955 = vmatmul.mubr.bf16.gmra.mrb[0].mxu0 %v912
    %v956 = vpop.f32.mrb[0].mxu0
    %v957 = vadd.f32 0.0, %v956
    %v958 = vpop.f32.mrb[0].mxu0
    %v959 = vpop.f32.mrb[0].mxu0
    %v960 = vpop.f32.mrb[0].mxu0
    %961 = vdwg.mxu0
    %v962 = vadd.f32 %v913, %v957
    %963 = vst [vmem:[#allocation2] sm:$0xff] %v962
    // Predicated region
    $region70: #{tpu_custom_call.1} parent=1 // pred_check
      %p964 = pneg %p117
    $region71: #{tpu_custom_call.1} parent=1 // pred_check_branch
      %966 = sbr.rel (%p964) target = $region73
    $region72: #{tpu_custom_call.1} parent=1 // pred_region
      %v967 = vld [vmem:[#allocation2] sm:$0xff]
      %v968 = vpack.c.bf16 %v967, %v967
      %v969 = vld [vmem:[#allocation12] sm:$0xf]
      %v970 = vld [vmem:[#allocation12 + $0x4] sm:$0xf]
      %v971 = vld [vmem:[#allocation12 + $0x8] sm:$0xf]
      %v972 = vld [vmem:[#allocation12 + $0xc] sm:$0xf]
      %v973 = vld [vmem:[#allocation12 + $0x10] sm:$0xf]
      %v974 = vld [vmem:[#allocation12 + $0x14] sm:$0xf]
      %v975 = vld [vmem:[#allocation12 + $0x18] sm:$0xf]
      %v976 = vld [vmem:[#allocation12 + $0x1c] sm:$0xf]
      %v977 = vld [vmem:[#allocation12 + $0x20] sm:$0xf]
      %v978 = vld [vmem:[#allocation12 + $0x24] sm:$0xf]
      %v979 = vld [vmem:[#allocation12 + $0x28] sm:$0xf]
      %v980 = vld [vmem:[#allocation12 + $0x2c] sm:$0xf]
      %v981 = vld [vmem:[#allocation12 + $0x30] sm:$0xf]
      %v982 = vld [vmem:[#allocation12 + $0x34] sm:$0xf]
      %v983 = vld [vmem:[#allocation12 + $0x38] sm:$0xf]
      %v984 = vld [vmem:[#allocation12 + $0x3c] sm:$0xf]
      %v985 = vld [vmem:[%s7] sm:$0x1]
      %v987 = vlaneseq
      %v988 = vshrl.u32 %v987, 7
      %v989 = vsub.s32 0, %v988
      %v990 = vrot.slane %v985, %v989
      %v1008 = vunpack.c.l.b16 %v969
      %v1009 = vunpack.c.l.b16 %v970
      %v1010 = vunpack.c.l.b16 %v971
      %v1011 = vunpack.c.l.b16 %v972
      %v1012 = vunpack.c.l.b16 %v973
      %v1013 = vunpack.c.l.b16 %v974
      %v1014 = vunpack.c.l.b16 %v975
      %v1015 = vunpack.c.l.b16 %v976
      %v1016 = vunpack.c.l.b16 %v977
      %v1017 = vunpack.c.l.b16 %v978
      %v1018 = vunpack.c.l.b16 %v979
      %v1019 = vunpack.c.l.b16 %v980
      %v1020 = vunpack.c.l.b16 %v981
      %v1021 = vunpack.c.l.b16 %v982
      %v1022 = vunpack.c.l.b16 %v983
      %v1023 = vunpack.c.l.b16 %v984
      %v1024 = vpack.c.b16 %v1009, %v1008
      %v1025 = vpack.c.b16 %v1011, %v1010
      %v1026 = vpack.c.b16 %v1013, %v1012
      %v1027 = vpack.c.b16 %v1015, %v1014
      %v1028 = vpack.c.b16 %v1017, %v1016
      %v1029 = vpack.c.b16 %v1019, %v1018
      %v1030 = vpack.c.b16 %v1021, %v1020
      %v1031 = vpack.c.b16 %v1023, %v1022
      %1040 = vmatprep.subr.bf16.mxu0 0
      %1041 = vmatpush1.bf16.msra.mxu0 %v1024
      %1042 = vmatprep.subr.bf16.mxu0 0
      %1043 = vmatpush1.bf16.msra.mxu0 %v1025
      %1044 = vmatprep.subr.bf16.mxu0 0
      %1045 = vmatpush1.bf16.msra.mxu0 %v1026
      %1046 = vmatprep.subr.bf16.mxu0 0
      %1047 = vmatpush1.bf16.msra.mxu0 %v1027
      %1048 = vmatprep.subr.bf16.mxu0 0
      %1049 = vmatpush1.bf16.msra.mxu0 %v1028
      %1050 = vmatprep.subr.bf16.mxu0 0
      %1051 = vmatpush1.bf16.msra.mxu0 %v1029
      %1052 = vmatprep.subr.bf16.mxu0 0
      %1053 = vmatpush1.bf16.msra.mxu0 %v1030
      %1054 = vmatprep.subr.bf16.mxu0 0
      %1055 = vmatpush1.bf16.msra.mxu0 %v1031
      %1056 = vmatprep.subr.bf16.mxu0 0
      %1057 = vmatpush1.bf16.msra.mxu0 0
      %1058 = vmatprep.subr.bf16.mxu0 0
      %1059 = vmatpush1.bf16.msra.mxu0 0
      %1060 = vmatprep.subr.bf16.mxu0 0
      %1061 = vmatpush1.bf16.msra.mxu0 0
      %1062 = vmatprep.subr.bf16.mxu0 0
      %1063 = vmatpush1.bf16.msra.mxu0 0
      %1064 = vmatprep.subr.bf16.mxu0 0
      %1065 = vmatpush1.bf16.msra.mxu0 0
      %1066 = vmatprep.subr.bf16.mxu0 0
      %1067 = vmatpush1.bf16.msra.mxu0 0
      %1068 = vmatprep.subr.bf16.mxu0 0
      %1069 = vmatpush1.bf16.msra.mxu0 0
      %1070 = vmatprep.subr.bf16.mxu0 0
      %1071 = vmatpush1.bf16.msra.mxu0 0
      %1072 = vmatprep.mubr.bf16.mxu0 0
      %1073 = vmatmul.mubr.bf16.gmra.mrb[0].mxu0 %v968
      %v1074 = vpop.f32.mrb[0].mxu0
      %v1075 = vadd.f32 %v990, %v1074
      %v1076 = vpop.f32.mrb[0].mxu0
      %v1077 = vpop.f32.mrb[0].mxu0
      %v1078 = vpop.f32.mrb[0].mxu0
      %1079 = vdwg.mxu0
      %v1080 = vmax.f32 %v1075, 0.0
      %v1081 = vpack.c.bf16 %v1080, %v1080
      %v1082 = vld [vmem:[#allocation13] sm:$0xf]
      %v1083 = vld [vmem:[#allocation13 + $0x4] sm:$0xf]
      %v1084 = vld [vmem:[#allocation13 + $0x8] sm:$0xf]
      %v1085 = vld [vmem:[#allocation13 + $0xc] sm:$0xf]
      %v1086 = vld [vmem:[#allocation13 + $0x10] sm:$0xf]
      %v1087 = vld [vmem:[#allocation13 + $0x14] sm:$0xf]
      %v1088 = vld [vmem:[#allocation13 + $0x18] sm:$0xf]
      %v1089 = vld [vmem:[#allocation13 + $0x1c] sm:$0xf]
      %v1090 = vld [vmem:[#allocation13 + $0x20] sm:$0xf]
      %v1091 = vld [vmem:[#allocation13 + $0x24] sm:$0xf]
      %v1092 = vld [vmem:[#allocation13 + $0x28] sm:$0xf]
      %v1093 = vld [vmem:[#allocation13 + $0x2c] sm:$0xf]
      %v1094 = vld [vmem:[#allocation13 + $0x30] sm:$0xf]
      %v1095 = vld [vmem:[#allocation13 + $0x34] sm:$0xf]
      %v1096 = vld [vmem:[#allocation13 + $0x38] sm:$0xf]
      %v1097 = vld [vmem:[#allocation13 + $0x3c] sm:$0xf]
      %v1098 = vld [vmem:[%s9] sm:$0x1]
      %v1100 = vlaneseq
      %v1101 = vshrl.u32 %v1100, 7
      %v1102 = vsub.s32 0, %v1101
      %v1103 = vrot.slane %v1098, %v1102
      %v1121 = vunpack.c.l.b16 %v1082
      %v1122 = vunpack.c.l.b16 %v1083
      %v1123 = vunpack.c.l.b16 %v1084
      %v1124 = vunpack.c.l.b16 %v1085
      %v1125 = vunpack.c.l.b16 %v1086
      %v1126 = vunpack.c.l.b16 %v1087
      %v1127 = vunpack.c.l.b16 %v1088
      %v1128 = vunpack.c.l.b16 %v1089
      %v1129 = vunpack.c.l.b16 %v1090
      %v1130 = vunpack.c.l.b16 %v1091
      %v1131 = vunpack.c.l.b16 %v1092
      %v1132 = vunpack.c.l.b16 %v1093
      %v1133 = vunpack.c.l.b16 %v1094
      %v1134 = vunpack.c.l.b16 %v1095
      %v1135 = vunpack.c.l.b16 %v1096
      %v1136 = vunpack.c.l.b16 %v1097
      %v1137 = vpack.c.b16 %v1122, %v1121
      %v1138 = vpack.c.b16 %v1124, %v1123
      %v1139 = vpack.c.b16 %v1126, %v1125
      %v1140 = vpack.c.b16 %v1128, %v1127
      %v1141 = vpack.c.b16 %v1130, %v1129
      %v1142 = vpack.c.b16 %v1132, %v1131
      %v1143 = vpack.c.b16 %v1134, %v1133
      %v1144 = vpack.c.b16 %v1136, %v1135
      %1153 = vmatprep.subr.bf16.mxu0 0
      %1154 = vmatpush1.bf16.msra.mxu0 %v1137
      %1155 = vmatprep.subr.bf16.mxu0 0
      %1156 = vmatpush1.bf16.msra.mxu0 %v1138
      %1157 = vmatprep.subr.bf16.mxu0 0
      %1158 = vmatpush1.bf16.msra.mxu0 %v1139
      %1159 = vmatprep.subr.bf16.mxu0 0
      %1160 = vmatpush1.bf16.msra.mxu0 %v1140
      %1161 = vmatprep.subr.bf16.mxu0 0
      %1162 = vmatpush1.bf16.msra.mxu0 %v1141
      %1163 = vmatprep.subr.bf16.mxu0 0
      %1164 = vmatpush1.bf16.msra.mxu0 %v1142
      %1165 = vmatprep.subr.bf16.mxu0 0
      %1166 = vmatpush1.bf16.msra.mxu0 %v1143
      %1167 = vmatprep.subr.bf16.mxu0 0
      %1168 = vmatpush1.bf16.msra.mxu0 %v1144
      %1169 = vmatprep.subr.bf16.mxu0 0
      %1170 = vmatpush1.bf16.msra.mxu0 0
      %1171 = vmatprep.subr.bf16.mxu0 0
      %1172 = vmatpush1.bf16.msra.mxu0 0
      %1173 = vmatprep.subr.bf16.mxu0 0
      %1174 = vmatpush1.bf16.msra.mxu0 0
      %1175 = vmatprep.subr.bf16.mxu0 0
      %1176 = vmatpush1.bf16.msra.mxu0 0
      %1177 = vmatprep.subr.bf16.mxu0 0
      %1178 = vmatpush1.bf16.msra.mxu0 0
      %1179 = vmatprep.subr.bf16.mxu0 0
      %1180 = vmatpush1.bf16.msra.mxu0 0
      %1181 = vmatprep.subr.bf16.mxu0 0
      %1182 = vmatpush1.bf16.msra.mxu0 0
      %1183 = vmatprep.subr.bf16.mxu0 0
      %1184 = vmatpush1.bf16.msra.mxu0 0
      %1185 = vmatprep.mubr.bf16.mxu0 0
      %1186 = vmatmul.mubr.bf16.gmra.mrb[0].mxu0 %v1081
      %v1187 = vpop.f32.mrb[0].mxu0
      %v1188 = vadd.f32 %v1103, %v1187
      %v1189 = vpop.f32.mrb[0].mxu0
      %v1190 = vpop.f32.mrb[0].mxu0
      %v1191 = vpop.f32.mrb[0].mxu0
      %1192 = vdwg.mxu0
      %v1193 = vmax.f32 %v1188, 0.0
      %1194 = vst [vmem:[#allocation15] sm:$0xff] %v1193
    $region73: #{tpu_custom_call.1} parent=1 // pred_fallthru
      _
    // Predicated region
    $region74: #{tpu_custom_call.1} parent=1 // pred_check
      _
    $region75: #{tpu_custom_call.1} parent=1 // pred_check_branch
      %1196 = sbr.rel (0) target = $region77
    $region76: #{tpu_custom_call.1} parent=1 // pred_region
      %s1198 = ssub.s32 128, 128
      %1199 = vsyncadd [#allocation6], %s1198
      %s1201 = sshll.u32 [#allocation15], 4
      %s1202 = int_to_ptr.vmem [resolvable:$true] %s1201
      %1204 = dma.vmem_to_hbm [thread:$0]  %s1202, 128, %s10, [#allocation6]
    $region77: #{tpu_custom_call.1} parent=1 // pred_fallthru
      _
    // Predicated region
    $region78: #{tpu_custom_call.1} parent=1 // pred_check
      _
    $region79: #{tpu_custom_call.1} parent=1 // pred_check_branch
      %1206 = sbr.rel (0) target = $region81
    $region80: #{tpu_custom_call.1} parent=1 // pred_region
      %1207 = dma.done [#allocation6], 128
    $region81: #{tpu_custom_call.1} parent=1 // pred_fallthru
      _
    %1208 = vsyncpa [#allocation5], 1
    %1209 = vsyncpa [#allocation8], 1
    %1210 = vsyncpa [#allocation11], 1
    %1211 = vsyncpa [#allocation14], 1
    %1212 = vsyncpa [#allocation6], 1

</llo_original>
